<compile_context>
chip_gen: v7x
topology: tpu7x:2x2x1
jax: 0.10.0
libtpu: 0.0.40
codegen_flags: <defaults>
</compile_context>

<pallas_src>
import numpy as np
import jax
import jax.numpy as jnp
from jax.experimental import pallas as pl
from jax.experimental.pallas import tpu as pltpu


EPS = 1e-5
LAYERS_CFG = (2, 2)      # small config (same arithmetic as the module defaults)
GROWTH = 8
BASE_WIDTH = 16
KSZ = 3
CPAD = 64                # fixed lane width of the DenseNet activation slab (max real channels = 44)


# ----------------------------- fused Pallas kernel -------------------------- #

def make_kernel(layers_cfg):
    nb = len(layers_cfg)

    def kernel(x_ref, stem_w_ref, s_stem_ref, bn_s_ref, bn_b_ref,
               dense_w_ref, trans_w_ref, *rest):
        mask_refs = rest[0:nb]
        pool_refs = rest[nb:2 * nb]
        s_avg_ref, w1_ref, w2_ref, w3_ref, fcb_ref, o_ref = rest[2 * nb:]

        f32, bf16 = jnp.float32, jnp.bfloat16

        # ---- stem: RevCompConv1D(k=3, stride=2, valid) + MaxPool1d(3, stride=2)
        # Input rows pair consecutive positions into lanes: row j = [x[2j](4), x[2j+1](4)].
        xr = x_ref[...]                                              # (BB*Lh, 8) f32
        y = jnp.dot(xr.astype(bf16), stem_w_ref[0], preferred_element_type=f32)
        y = y + jnp.dot(jnp.roll(xr, -1, axis=0).astype(bf16), stem_w_ref[1],
                        preferred_element_type=f32)                  # (BB*Lh, 64); last row/sample unused
        m = jnp.maximum(y, jnp.roll(y, -1, axis=0))
        m = jnp.maximum(m, jnp.roll(y, -2, axis=0))                  # m[i] = max(y[i], y[i+1], y[i+2])
        h = jnp.dot(s_stem_ref[...], m.astype(bf16), preferred_element_type=f32)  # pick rows 2j -> (BB*l2, 64)

        bns = bn_s_ref[...]                                          # (n_bn, 64) f32, loaded once
        bnb = bn_b_ref[...]
        bi_bn = 0
        bi_dw = 0

        # ---- dense blocks + transitions (activation stays a fixed 64-lane f32 slab in vregs)
        for bi, n_layers in enumerate(layers_cfg):
            mask = mask_refs[bi][...]                                # (BB*L, 2): [not-first-row, not-last-row]
            mask_l, mask_r = mask[:, 0:1], mask[:, 1:2]
            for _ in range(n_layers):
                s = bns[bi_bn:bi_bn + 1, :]
                b = bnb[bi_bn:bi_bn + 1, :]
                bi_bn += 1
                a = jnp.maximum(h * s + b, 0.0)                      # BN(eval) + ReLU (f32)
                left = jnp.roll(a, 1, axis=0) * mask_l               # a[i-1] with per-sample zero halo
                right = jnp.roll(a, -1, axis=0) * mask_r             # a[i+1] with per-sample zero halo
                # k=3 'same' conv as 3 accumulated MXU dots; weight columns place the G new
                # channels into padded lanes [Cin:Cin+G], so `h + out` realises torch.cat.
                out = jnp.dot(left.astype(bf16), dense_w_ref[bi_dw], preferred_element_type=f32)
                out = out + jnp.dot(a.astype(bf16), dense_w_ref[bi_dw + 1], preferred_element_type=f32)
                out = out + jnp.dot(right.astype(bf16), dense_w_ref[bi_dw + 2], preferred_element_type=f32)
                bi_dw += 3
                h = h + out
            # transition: BN+ReLU -> AvgPool1d(2,2) (0.5 folded into the selection constant,
            # pooled before the 1x1 conv since they commute) -> 1x1 conv.
            s = bns[bi_bn:bi_bn + 1, :]
            b = bnb[bi_bn:bi_bn + 1, :]
            bi_bn += 1
            a = jnp.maximum(h * s + b, 0.0)
            p = jnp.dot(pool_refs[bi][...], a.astype(bf16), preferred_element_type=f32)
            h = jnp.dot(p.astype(bf16), trans_w_ref[bi], preferred_element_type=f32)

        # ---- head: AdaptiveAvgPool1d(1) + Linear(256)+ReLU + Linear(96)+ReLU + Linear(1)
        pooled = jnp.dot(s_avg_ref[...], h.astype(bf16), preferred_element_type=f32)   # (BB, 64)
        b1 = fcb_ref[0:1, 0:256]
        b2 = fcb_ref[1:2, 0:96]
        b3 = fcb_ref[2:3, 0:1]
        z = jnp.maximum(jnp.dot(pooled.astype(bf16), w1_ref[...], preferred_element_type=f32) + b1, 0.0)
        z = jnp.maximum(jnp.dot(z.astype(bf16), w2_ref[...], preferred_element_type=f32) + b2, 0.0)
        o_ref[...] = jnp.dot(z.astype(bf16), w3_ref[...], preferred_element_type=f32) + b3

    return kernel


# ----------------------------- host-side packing ---------------------------- #

def _pad2(a, rows, cols):
    out = np.zeros((rows, cols), np.float32)
    out[:a.shape[0], :a.shape[1]] = a
    return out


def _pad_vec(v, n):
    out = np.zeros((n,), np.float32)
    out[:v.shape[0]] = v
    return out


def _fold_bn(bn):
    gamma, beta, mean, var = (np.asarray(t, np.float32) for t in bn)
    s = gamma / np.sqrt(var + EPS)
    return s, beta - mean * s


def pack_params(params, layers_cfg=LAYERS_CFG):
    """Fold BN stats and repack torch-layout weights into the kernel's padded bf16 layout."""
    bf16 = jnp.bfloat16
    packed = {}

    # stem weight (base_width, 4, 3) -> two (8, CPAD) tap matrices for the paired-lane input.
    W = np.asarray(params["stem_w"], np.float32)
    t0, t1, t2 = (W[:, :, k].T for k in range(KSZ))                    # (4, bw)
    w01 = np.concatenate([t0, t1], axis=0)                             # taps x[2i], x[2i+1]
    w2p = np.concatenate([t2, np.zeros_like(t2)], axis=0)              # tap  x[2i+2]
    packed["stem_w"] = jnp.asarray(
        np.stack([_pad2(w01, 8, CPAD), _pad2(w2p, 8, CPAD)]), bf16)

    bn_s, bn_b, dense_w, trans_w = [], [], [], []
    for blk in params["blocks"]:
        for layer in blk["dense"]:
            s, b = _fold_bn(layer["bn"])
            cin = s.shape[0]
            bn_s.append(_pad_vec(s, CPAD)); bn_b.append(_pad_vec(b, CPAD))
            Wd = np.asarray(layer["w"], np.float32)                    # (G, cin, 3)
            G = Wd.shape[0]
            assert cin + G <= CPAD
            for k in range(KSZ):
                Wk = np.zeros((CPAD, CPAD), np.float32)
                Wk[:cin, cin:cin + G] = Wd[:, :, k].T                  # new channels -> padded lanes
                dense_w.append(Wk)
        tr = blk["trans"]
        s, b = _fold_bn(tr["bn"])
        cin = s.shape[0]
        bn_s.append(_pad_vec(s, CPAD)); bn_b.append(_pad_vec(b, CPAD))
        Wt = np.asarray(tr["w"], np.float32)[:, :, 0].T                # (cin, cout)
        assert Wt.shape[1] <= CPAD
        trans_w.append(_pad2(Wt, CPAD, CPAD))

    packed["bn_s"] = jnp.asarray(np.stack(bn_s), jnp.float32)
    packed["bn_b"] = jnp.asarray(np.stack(bn_b), jnp.float32)
    packed["dense_w"] = jnp.asarray(np.stack(dense_w), bf16)           # (n_dense*3, 64, 64)
    packed["trans_w"] = jnp.asarray(np.stack(trans_w), bf16)           # (n_blocks, 64, 64)

    fc = params["fc"]
    packed["fc_w1"] = jnp.asarray(_pad2(np.asarray(fc["w1"]).T, CPAD, 256), bf16)
    packed["fc_w2"] = jnp.asarray(np.asarray(fc["w2"]).T, bf16)        # (256, 96)
    packed["fc_w3"] = jnp.asarray(np.asarray(fc["w3"]).T, bf16)        # (96, 1)
    fcb = np.zeros((3, 256), np.float32)
    fcb[0, :256] = np.asarray(fc["b1"])
    fcb[1, :96] = np.asarray(fc["b2"])
    fcb[2, :1] = np.asarray(fc["b3"])
    packed["fc_b"] = jnp.asarray(fcb)
    return packed


def build_geometry(BB, Lin, layers_cfg=LAYERS_CFG):
    """Batch-block-dependent selection constants (block-diagonal over the BB samples)."""
    bf16 = jnp.bfloat16
    Lh = Lin // 2
    l1 = (Lin - KSZ) // 2 + 1              # valid stride-2 conv length
    l2 = (l1 - 3) // 2 + 1                 # MaxPool1d(3, stride=2)
    assert l1 >= 3 and l2 >= 1

    s_stem = np.zeros((BB * l2, BB * Lh), np.float32)   # pick rows 2j of the 3-window running max
    for b in range(BB):
        for j in range(l2):
            s_stem[b * l2 + j, b * Lh + 2 * j] = 1.0

    masks, pools = [], []
    L = l2
    for _ in layers_cfg:
        mk = np.ones((BB * L, 2), np.float32)
        for b in range(BB):
            mk[b * L, 0] = 0.0             # position 0 has no left neighbour ('same' zero pad)
            mk[b * L + L - 1, 1] = 0.0     # position L-1 has no right neighbour
        masks.append(mk)
        Lo = L // 2                        # AvgPool1d(2, stride=2), tail dropped
        assert Lo >= 1
        pm = np.zeros((BB * Lo, BB * L), np.float32)
        for b in range(BB):
            for j in range(Lo):
                pm[b * Lo + j, b * L + 2 * j] = 0.5
                pm[b * Lo + j, b * L + 2 * j + 1] = 0.5
        pools.append(pm)
        L = Lo

    s_avg = np.zeros((BB, BB * L), np.float32)          # AdaptiveAvgPool1d(1): per-sample mean
    for b in range(BB):
        s_avg[b, b * L:(b + 1) * L] = 1.0 / L

    return {"s_stem": jnp.asarray(s_stem, bf16),
            "masks": [jnp.asarray(m, jnp.float32) for m in masks],
            "pools": [jnp.asarray(p, bf16) for p in pools],
            "s_avg": jnp.asarray(s_avg, bf16),
            "Lh": Lh}


def densenet_forward(x_ncl, params, layers_cfg=LAYERS_CFG):
    # x_ncl: (B, 4, L) PyTorch NCL layout.
    B, Cx, Lin = x_ncl.shape
    assert Cx == 4 and Lin % 2 == 0

    BB = B if B <= 8 else 8                 # batch block; real batches get multiple parallel grid steps
    Bp = -(-B // BB) * BB
    x = jnp.transpose(x_ncl, (0, 2, 1)).astype(jnp.float32)            # NCL -> NLC
    if Bp != B:
        x = jnp.concatenate([x, jnp.zeros((Bp - B, Lin, 4), x.dtype)], axis=0)
    Lh = Lin // 2
    # pair consecutive positions into lanes and flatten batch into rows: row b*Lh+j = [x[b,2j], x[b,2j+1]]
    x2 = x.reshape(Bp * Lh, 8)

    pk = pack_params(params, layers_cfg)
    geo = build_geometry(BB, Lin, layers_cfg)

    flat = [pk["stem_w"], geo["s_stem"], pk["bn_s"], pk["bn_b"],
            pk["dense_w"], pk["trans_w"], *geo["masks"], *geo["pools"],
            geo["s_avg"], pk["fc_w1"], pk["fc_w2"], pk["fc_w3"], pk["fc_b"]]

    in_specs = [pl.BlockSpec((BB * Lh, 8), lambda i: (i, 0))]
    for a in flat:
        in_specs.append(pl.BlockSpec(a.shape, lambda i, nd=a.ndim: (0,) * nd))

    out = pl.pallas_call(
        make_kernel(layers_cfg),
        out_shape=jax.ShapeDtypeStruct((Bp, 1), jnp.float32),
        grid=(Bp // BB,),
        in_specs=in_specs,
        out_specs=pl.BlockSpec((BB, 1), lambda i: (i, 0)),
        compiler_params=pltpu.CompilerParams(dimension_semantics=("parallel",)),
    )(x2, *flat)
    return out[:B]


# ----------------------------- random torch-layout parameters --------------- #

class KeyGen:
    def __init__(self, key):
        self.key = key

    def __call__(self):
        self.key, sub = jax.random.split(self.key)
        return sub


def build_params(key, layers_cfg=LAYERS_CFG):
    kg = KeyGen(key)

    def bn(c):
        gamma = 1.0 + 0.1 * jax.random.normal(kg(), (c,), jnp.float32)
        beta = 0.1 * jax.random.normal(kg(), (c,), jnp.float32)
        mean = 0.1 * jax.random.normal(kg(), (c,), jnp.float32)
        var = 0.5 + jnp.abs(jax.random.normal(kg(), (c,), jnp.float32))
        return (gamma, beta, mean, var)

    def conv(cout, cin, k):
        return 0.1 * jax.random.normal(kg(), (cout, cin, k), jnp.float32)

    # RevCompConv1D: base_width//2 filters + their reverse-complement copies (assumed, see TODO above).
    wr = 0.1 * jax.random.normal(kg(), (BASE_WIDTH // 2, 4, KSZ), jnp.float32)
    stem_w = jnp.concatenate([wr, wr[:, ::-1, ::-1]], axis=0)           # (base_width, 4, 3)

    blocks = []
    cin = BASE_WIDTH
    for n in layers_cfg:
        dense = []
        for _ in range(n):
            dense.append({"bn": bn(cin), "w": conv(GROWTH, cin, 3)})
            cin += GROWTH
        cout = int(cin * 0.9)
        blocks.append({"dense": dense, "trans": {"bn": bn(cin), "w": conv(cout, cin, 1)}})
        cin = cout

    fc = {"w1": 0.1 * jax.random.normal(kg(), (256, cin), jnp.float32),
          "b1": 0.1 * jax.random.normal(kg(), (256,), jnp.float32),
          "w2": 0.1 * jax.random.normal(kg(), (96, 256), jnp.float32),
          "b2": 0.1 * jax.random.normal(kg(), (96,), jnp.float32),
          "w3": 0.1 * jax.random.normal(kg(), (1, 96), jnp.float32),
          "b3": 0.1 * jax.random.normal(kg(), (1,), jnp.float32)}
    return {"stem_w": stem_w, "blocks": blocks, "fc": fc}


if __name__ == "__main__":
    key = jax.random.PRNGKey(0)
    kx, kp = jax.random.split(key)
    x = jax.random.normal(kx, (2, 4, 64), jnp.float32)   # (batch, 4 nucleotides, seq len)
    params = build_params(kp)
    y = densenet_forward(x, params)
    jax.block_until_ready(y)
    assert y.shape == (2, 1) and y.dtype == jnp.float32
    print("KERNEL_OK")
</pallas_src>

<mosaic_0001>
module attributes {stable_mosaic.version = 11 : i64} {
  func.func @kernel(%arg0: i32, %arg1: memref<64x8xf32, #tpu.memory_space<vmem>>, %arg2: memref<2x8x64xbf16, #tpu.memory_space<vmem>>, %arg3: memref<30x64xbf16, #tpu.memory_space<vmem>>, %arg4: memref<6x64xf32, #tpu.memory_space<vmem>>, %arg5: memref<6x64xf32, #tpu.memory_space<vmem>>, %arg6: memref<12x64x64xbf16, #tpu.memory_space<vmem>>, %arg7: memref<2x64x64xbf16, #tpu.memory_space<vmem>>, %arg8: memref<30x2xf32, #tpu.memory_space<vmem>>, %arg9: memref<14x2xf32, #tpu.memory_space<vmem>>, %arg10: memref<14x30xbf16, #tpu.memory_space<vmem>>, %arg11: memref<6x14xbf16, #tpu.memory_space<vmem>>, %arg12: memref<2x6xbf16, #tpu.memory_space<vmem>>, %arg13: memref<64x256xbf16, #tpu.memory_space<vmem>>, %arg14: memref<256x96xbf16, #tpu.memory_space<vmem>>, %arg15: memref<96x1xbf16, #tpu.memory_space<vmem>>, %arg16: memref<3x256xf32, #tpu.memory_space<vmem>>, %arg17: memref<2x1xf32, #tpu.memory_space<vmem>>) attributes {dimension_semantics = [#tpu.dimension_semantics<parallel>], iteration_bounds = array<i64: 1>, scalar_prefetch = 0 : i64, scratch_operands = 0 : i64, tpu.core_type = #tpu.core_type<tc>, window_params = [{transform_indices = @transform_0, window_bounds = array<i64: 64, 8>}, {pipeline_mode = #tpu.pipeline_mode<synchronous>, transform_indices = @transform_1, window_bounds = array<i64: 2, 8, 64>}, {pipeline_mode = #tpu.pipeline_mode<synchronous>, transform_indices = @transform_2, window_bounds = array<i64: 30, 64>}, {pipeline_mode = #tpu.pipeline_mode<synchronous>, transform_indices = @transform_3, window_bounds = array<i64: 6, 64>}, {pipeline_mode = #tpu.pipeline_mode<synchronous>, transform_indices = @transform_4, window_bounds = array<i64: 6, 64>}, {pipeline_mode = #tpu.pipeline_mode<synchronous>, transform_indices = @transform_5, window_bounds = array<i64: 12, 64, 64>}, {pipeline_mode = #tpu.pipeline_mode<synchronous>, transform_indices = @transform_6, window_bounds = array<i64: 2, 64, 64>}, {pipeline_mode = #tpu.pipeline_mode<synchronous>, transform_indices = @transform_7, window_bounds = array<i64: 30, 2>}, {pipeline_mode = #tpu.pipeline_mode<synchronous>, transform_indices = @transform_8, window_bounds = array<i64: 14, 2>}, {pipeline_mode = #tpu.pipeline_mode<synchronous>, transform_indices = @transform_9, window_bounds = array<i64: 14, 30>}, {pipeline_mode = #tpu.pipeline_mode<synchronous>, transform_indices = @transform_10, window_bounds = array<i64: 6, 14>}, {pipeline_mode = #tpu.pipeline_mode<synchronous>, transform_indices = @transform_11, window_bounds = array<i64: 2, 6>}, {pipeline_mode = #tpu.pipeline_mode<synchronous>, transform_indices = @transform_12, window_bounds = array<i64: 64, 256>}, {pipeline_mode = #tpu.pipeline_mode<synchronous>, transform_indices = @transform_13, window_bounds = array<i64: 256, 96>}, {pipeline_mode = #tpu.pipeline_mode<synchronous>, transform_indices = @transform_14, window_bounds = array<i64: 96, 1>}, {pipeline_mode = #tpu.pipeline_mode<synchronous>, transform_indices = @transform_15, window_bounds = array<i64: 3, 256>}, {transform_indices = @transform_16, window_bounds = array<i64: 2, 1>}]} {
    %c0 = arith.constant 0 : index
    %c0_0 = arith.constant 0 : index
    %0 = vector.load %arg1[%c0, %c0_0] : memref<64x8xf32, #tpu.memory_space<vmem>>, vector<64x8xf32>
    %1 = arith.truncf %0 : vector<64x8xf32> to vector<64x8xbf16>
    %c0_1 = arith.constant 0 : index
    %c0_2 = arith.constant 0 : index
    %c0_3 = arith.constant 0 : index
    %2 = vector.load %arg2[%c0_1, %c0_2, %c0_3] : memref<2x8x64xbf16, #tpu.memory_space<vmem>>, vector<1x8x64xbf16>
    %3 = vector.shape_cast %2 : vector<1x8x64xbf16> to vector<8x64xbf16>
    %cst = arith.constant dense<0.000000e+00> : vector<64x64xf32>
    %4 = tpu.matmul %1, %3, %cst {dimension_numbers = #tpu.dot_dimension_numbers<[1], [0], [0], [1], [0, 0, 1, 1], [], []>} : vector<64x8xbf16>, vector<8x64xbf16>, vector<64x64xf32> -> vector<64x64xf32>
    %5 = vector.extract_strided_slice %0 {offsets = [1, 0], sizes = [63, 8], strides = [1, 1]} : vector<64x8xf32> to vector<63x8xf32>
    %6 = vector.extract_strided_slice %0 {offsets = [0, 0], sizes = [1, 8], strides = [1, 1]} : vector<64x8xf32> to vector<1x8xf32>
    %7 = tpu.concatenate %5, %6 in 0 : vector<63x8xf32>, vector<1x8xf32> -> vector<64x8xf32>
    %8 = arith.truncf %7 : vector<64x8xf32> to vector<64x8xbf16>
    %c1 = arith.constant 1 : index
    %c0_4 = arith.constant 0 : index
    %c0_5 = arith.constant 0 : index
    %9 = vector.load %arg2[%c1, %c0_4, %c0_5] : memref<2x8x64xbf16, #tpu.memory_space<vmem>>, vector<1x8x64xbf16>
    %10 = vector.shape_cast %9 : vector<1x8x64xbf16> to vector<8x64xbf16>
    %cst_6 = arith.constant dense<0.000000e+00> : vector<64x64xf32>
    %11 = tpu.matmul %8, %10, %cst_6 {dimension_numbers = #tpu.dot_dimension_numbers<[1], [0], [0], [1], [0, 0, 1, 1], [], []>} : vector<64x8xbf16>, vector<8x64xbf16>, vector<64x64xf32> -> vector<64x64xf32>
    %12 = arith.addf %4, %11 : vector<64x64xf32>
    %13 = vector.extract_strided_slice %12 {offsets = [1, 0], sizes = [63, 64], strides = [1, 1]} : vector<64x64xf32> to vector<63x64xf32>
    %14 = vector.extract_strided_slice %12 {offsets = [0, 0], sizes = [1, 64], strides = [1, 1]} : vector<64x64xf32> to vector<1x64xf32>
    %15 = tpu.concatenate %13, %14 in 0 : vector<63x64xf32>, vector<1x64xf32> -> vector<64x64xf32>
    %16 = arith.maximumf %12, %15 : vector<64x64xf32>
    %17 = vector.extract_strided_slice %12 {offsets = [2, 0], sizes = [62, 64], strides = [1, 1]} : vector<64x64xf32> to vector<62x64xf32>
    %18 = vector.extract_strided_slice %12 {offsets = [0, 0], sizes = [2, 64], strides = [1, 1]} : vector<64x64xf32> to vector<2x64xf32>
    %19 = tpu.concatenate %17, %18 in 0 : vector<62x64xf32>, vector<2x64xf32> -> vector<64x64xf32>
    %20 = arith.maximumf %16, %19 : vector<64x64xf32>
    %c0_7 = arith.constant 0 : index
    %c0_8 = arith.constant 0 : index
    %21 = vector.load %arg3[%c0_7, %c0_8] : memref<30x64xbf16, #tpu.memory_space<vmem>>, vector<30x64xbf16>
    %22 = arith.truncf %20 : vector<64x64xf32> to vector<64x64xbf16>
    %cst_9 = arith.constant dense<0.000000e+00> : vector<30x64xf32>
    %23 = tpu.matmul %21, %22, %cst_9 {dimension_numbers = #tpu.dot_dimension_numbers<[1], [0], [0], [1], [0, 0, 1, 1], [], []>} : vector<30x64xbf16>, vector<64x64xbf16>, vector<30x64xf32> -> vector<30x64xf32>
    %c0_10 = arith.constant 0 : index
    %c0_11 = arith.constant 0 : index
    %24 = vector.load %arg4[%c0_10, %c0_11] : memref<6x64xf32, #tpu.memory_space<vmem>>, vector<6x64xf32>
    %c0_12 = arith.constant 0 : index
    %c0_13 = arith.constant 0 : index
    %25 = vector.load %arg5[%c0_12, %c0_13] : memref<6x64xf32, #tpu.memory_space<vmem>>, vector<6x64xf32>
    %c0_14 = arith.constant 0 : index
    %c0_15 = arith.constant 0 : index
    %26 = vector.load %arg8[%c0_14, %c0_15] : memref<30x2xf32, #tpu.memory_space<vmem>>, vector<30x2xf32>
    %27 = vector.extract_strided_slice %26 {offsets = [0, 0], sizes = [30, 1], strides = [1, 1]} : vector<30x2xf32> to vector<30x1xf32>
    %28 = vector.extract_strided_slice %26 {offsets = [0, 1], sizes = [30, 1], strides = [1, 1]} : vector<30x2xf32> to vector<30x1xf32>
    %29 = vector.extract_strided_slice %24 {offsets = [0, 0], sizes = [1, 64], strides = [1, 1]} : vector<6x64xf32> to vector<1x64xf32>
    %30 = vector.extract_strided_slice %25 {offsets = [0, 0], sizes = [1, 64], strides = [1, 1]} : vector<6x64xf32> to vector<1x64xf32>
    %31 = vector.broadcast %29 : vector<1x64xf32> to vector<30x64xf32>
    %32 = arith.mulf %23, %31 : vector<30x64xf32>
    %33 = vector.broadcast %30 : vector<1x64xf32> to vector<30x64xf32>
    %34 = arith.addf %32, %33 : vector<30x64xf32>
    %cst_16 = arith.constant 0.000000e+00 : f32
    %35 = vector.broadcast %cst_16 : f32 to vector<30x64xf32>
    %36 = arith.maximumf %34, %35 : vector<30x64xf32>
    %37 = vector.extract_strided_slice %36 {offsets = [29, 0], sizes = [1, 64], strides = [1, 1]} : vector<30x64xf32> to vector<1x64xf32>
    %38 = vector.extract_strided_slice %36 {offsets = [0, 0], sizes = [29, 64], strides = [1, 1]} : vector<30x64xf32> to vector<29x64xf32>
    %39 = tpu.concatenate %37, %38 in 0 : vector<1x64xf32>, vector<29x64xf32> -> vector<30x64xf32>
    %40 = vector.broadcast %27 : vector<30x1xf32> to vector<30x64xf32>
    %41 = arith.mulf %39, %40 : vector<30x64xf32>
    %42 = vector.extract_strided_slice %36 {offsets = [1, 0], sizes = [29, 64], strides = [1, 1]} : vector<30x64xf32> to vector<29x64xf32>
    %43 = vector.extract_strided_slice %36 {offsets = [0, 0], sizes = [1, 64], strides = [1, 1]} : vector<30x64xf32> to vector<1x64xf32>
    %44 = tpu.concatenate %42, %43 in 0 : vector<29x64xf32>, vector<1x64xf32> -> vector<30x64xf32>
    %45 = vector.broadcast %28 : vector<30x1xf32> to vector<30x64xf32>
    %46 = arith.mulf %44, %45 : vector<30x64xf32>
    %47 = arith.truncf %41 : vector<30x64xf32> to vector<30x64xbf16>
    %c0_17 = arith.constant 0 : index
    %c0_18 = arith.constant 0 : index
    %c0_19 = arith.constant 0 : index
    %48 = vector.load %arg6[%c0_17, %c0_18, %c0_19] : memref<12x64x64xbf16, #tpu.memory_space<vmem>>, vector<1x64x64xbf16>
    %49 = vector.shape_cast %48 : vector<1x64x64xbf16> to vector<64x64xbf16>
    %cst_20 = arith.constant dense<0.000000e+00> : vector<30x64xf32>
    %50 = tpu.matmul %47, %49, %cst_20 {dimension_numbers = #tpu.dot_dimension_numbers<[1], [0], [0], [1], [0, 0, 1, 1], [], []>} : vector<30x64xbf16>, vector<64x64xbf16>, vector<30x64xf32> -> vector<30x64xf32>
    %51 = arith.truncf %36 : vector<30x64xf32> to vector<30x64xbf16>
    %c1_21 = arith.constant 1 : index
    %c0_22 = arith.constant 0 : index
    %c0_23 = arith.constant 0 : index
    %52 = vector.load %arg6[%c1_21, %c0_22, %c0_23] : memref<12x64x64xbf16, #tpu.memory_space<vmem>>, vector<1x64x64xbf16>
    %53 = vector.shape_cast %52 : vector<1x64x64xbf16> to vector<64x64xbf16>
    %cst_24 = arith.constant dense<0.000000e+00> : vector<30x64xf32>
    %54 = tpu.matmul %51, %53, %cst_24 {dimension_numbers = #tpu.dot_dimension_numbers<[1], [0], [0], [1], [0, 0, 1, 1], [], []>} : vector<30x64xbf16>, vector<64x64xbf16>, vector<30x64xf32> -> vector<30x64xf32>
    %55 = arith.addf %50, %54 : vector<30x64xf32>
    %56 = arith.truncf %46 : vector<30x64xf32> to vector<30x64xbf16>
    %c2 = arith.constant 2 : index
    %c0_25 = arith.constant 0 : index
    %c0_26 = arith.constant 0 : index
    %57 = vector.load %arg6[%c2, %c0_25, %c0_26] : memref<12x64x64xbf16, #tpu.memory_space<vmem>>, vector<1x64x64xbf16>
    %58 = vector.shape_cast %57 : vector<1x64x64xbf16> to vector<64x64xbf16>
    %cst_27 = arith.constant dense<0.000000e+00> : vector<30x64xf32>
    %59 = tpu.matmul %56, %58, %cst_27 {dimension_numbers = #tpu.dot_dimension_numbers<[1], [0], [0], [1], [0, 0, 1, 1], [], []>} : vector<30x64xbf16>, vector<64x64xbf16>, vector<30x64xf32> -> vector<30x64xf32>
    %60 = arith.addf %55, %59 : vector<30x64xf32>
    %61 = arith.addf %23, %60 : vector<30x64xf32>
    %62 = vector.extract_strided_slice %24 {offsets = [1, 0], sizes = [1, 64], strides = [1, 1]} : vector<6x64xf32> to vector<1x64xf32>
    %63 = vector.extract_strided_slice %25 {offsets = [1, 0], sizes = [1, 64], strides = [1, 1]} : vector<6x64xf32> to vector<1x64xf32>
    %64 = vector.broadcast %62 : vector<1x64xf32> to vector<30x64xf32>
    %65 = arith.mulf %61, %64 : vector<30x64xf32>
    %66 = vector.broadcast %63 : vector<1x64xf32> to vector<30x64xf32>
    %67 = arith.addf %65, %66 : vector<30x64xf32>
    %cst_28 = arith.constant 0.000000e+00 : f32
    %68 = vector.broadcast %cst_28 : f32 to vector<30x64xf32>
    %69 = arith.maximumf %67, %68 : vector<30x64xf32>
    %70 = vector.extract_strided_slice %69 {offsets = [29, 0], sizes = [1, 64], strides = [1, 1]} : vector<30x64xf32> to vector<1x64xf32>
    %71 = vector.extract_strided_slice %69 {offsets = [0, 0], sizes = [29, 64], strides = [1, 1]} : vector<30x64xf32> to vector<29x64xf32>
    %72 = tpu.concatenate %70, %71 in 0 : vector<1x64xf32>, vector<29x64xf32> -> vector<30x64xf32>
    %73 = vector.broadcast %27 : vector<30x1xf32> to vector<30x64xf32>
    %74 = arith.mulf %72, %73 : vector<30x64xf32>
    %75 = vector.extract_strided_slice %69 {offsets = [1, 0], sizes = [29, 64], strides = [1, 1]} : vector<30x64xf32> to vector<29x64xf32>
    %76 = vector.extract_strided_slice %69 {offsets = [0, 0], sizes = [1, 64], strides = [1, 1]} : vector<30x64xf32> to vector<1x64xf32>
    %77 = tpu.concatenate %75, %76 in 0 : vector<29x64xf32>, vector<1x64xf32> -> vector<30x64xf32>
    %78 = vector.broadcast %28 : vector<30x1xf32> to vector<30x64xf32>
    %79 = arith.mulf %77, %78 : vector<30x64xf32>
    %80 = arith.truncf %74 : vector<30x64xf32> to vector<30x64xbf16>
    %c3 = arith.constant 3 : index
    %c0_29 = arith.constant 0 : index
    %c0_30 = arith.constant 0 : index
    %81 = vector.load %arg6[%c3, %c0_29, %c0_30] : memref<12x64x64xbf16, #tpu.memory_space<vmem>>, vector<1x64x64xbf16>
    %82 = vector.shape_cast %81 : vector<1x64x64xbf16> to vector<64x64xbf16>
    %cst_31 = arith.constant dense<0.000000e+00> : vector<30x64xf32>
    %83 = tpu.matmul %80, %82, %cst_31 {dimension_numbers = #tpu.dot_dimension_numbers<[1], [0], [0], [1], [0, 0, 1, 1], [], []>} : vector<30x64xbf16>, vector<64x64xbf16>, vector<30x64xf32> -> vector<30x64xf32>
    %84 = arith.truncf %69 : vector<30x64xf32> to vector<30x64xbf16>
    %c4 = arith.constant 4 : index
    %c0_32 = arith.constant 0 : index
    %c0_33 = arith.constant 0 : index
    %85 = vector.load %arg6[%c4, %c0_32, %c0_33] : memref<12x64x64xbf16, #tpu.memory_space<vmem>>, vector<1x64x64xbf16>
    %86 = vector.shape_cast %85 : vector<1x64x64xbf16> to vector<64x64xbf16>
    %cst_34 = arith.constant dense<0.000000e+00> : vector<30x64xf32>
    %87 = tpu.matmul %84, %86, %cst_34 {dimension_numbers = #tpu.dot_dimension_numbers<[1], [0], [0], [1], [0, 0, 1, 1], [], []>} : vector<30x64xbf16>, vector<64x64xbf16>, vector<30x64xf32> -> vector<30x64xf32>
    %88 = arith.addf %83, %87 : vector<30x64xf32>
    %89 = arith.truncf %79 : vector<30x64xf32> to vector<30x64xbf16>
    %c5 = arith.constant 5 : index
    %c0_35 = arith.constant 0 : index
    %c0_36 = arith.constant 0 : index
    %90 = vector.load %arg6[%c5, %c0_35, %c0_36] : memref<12x64x64xbf16, #tpu.memory_space<vmem>>, vector<1x64x64xbf16>
    %91 = vector.shape_cast %90 : vector<1x64x64xbf16> to vector<64x64xbf16>
    %cst_37 = arith.constant dense<0.000000e+00> : vector<30x64xf32>
    %92 = tpu.matmul %89, %91, %cst_37 {dimension_numbers = #tpu.dot_dimension_numbers<[1], [0], [0], [1], [0, 0, 1, 1], [], []>} : vector<30x64xbf16>, vector<64x64xbf16>, vector<30x64xf32> -> vector<30x64xf32>
    %93 = arith.addf %88, %92 : vector<30x64xf32>
    %94 = arith.addf %61, %93 : vector<30x64xf32>
    %95 = vector.extract_strided_slice %24 {offsets = [2, 0], sizes = [1, 64], strides = [1, 1]} : vector<6x64xf32> to vector<1x64xf32>
    %96 = vector.extract_strided_slice %25 {offsets = [2, 0], sizes = [1, 64], strides = [1, 1]} : vector<6x64xf32> to vector<1x64xf32>
    %97 = vector.broadcast %95 : vector<1x64xf32> to vector<30x64xf32>
    %98 = arith.mulf %94, %97 : vector<30x64xf32>
    %99 = vector.broadcast %96 : vector<1x64xf32> to vector<30x64xf32>
    %100 = arith.addf %98, %99 : vector<30x64xf32>
    %cst_38 = arith.constant 0.000000e+00 : f32
    %101 = vector.broadcast %cst_38 : f32 to vector<30x64xf32>
    %102 = arith.maximumf %100, %101 : vector<30x64xf32>
    %c0_39 = arith.constant 0 : index
    %c0_40 = arith.constant 0 : index
    %103 = vector.load %arg10[%c0_39, %c0_40] : memref<14x30xbf16, #tpu.memory_space<vmem>>, vector<14x30xbf16>
    %104 = arith.truncf %102 : vector<30x64xf32> to vector<30x64xbf16>
    %cst_41 = arith.constant dense<0.000000e+00> : vector<14x64xf32>
    %105 = tpu.matmul %103, %104, %cst_41 {dimension_numbers = #tpu.dot_dimension_numbers<[1], [0], [0], [1], [0, 0, 1, 1], [], []>} : vector<14x30xbf16>, vector<30x64xbf16>, vector<14x64xf32> -> vector<14x64xf32>
    %106 = arith.truncf %105 : vector<14x64xf32> to vector<14x64xbf16>
    %c0_42 = arith.constant 0 : index
    %c0_43 = arith.constant 0 : index
    %c0_44 = arith.constant 0 : index
    %107 = vector.load %arg7[%c0_42, %c0_43, %c0_44] : memref<2x64x64xbf16, #tpu.memory_space<vmem>>, vector<1x64x64xbf16>
    %108 = vector.shape_cast %107 : vector<1x64x64xbf16> to vector<64x64xbf16>
    %cst_45 = arith.constant dense<0.000000e+00> : vector<14x64xf32>
    %109 = tpu.matmul %106, %108, %cst_45 {dimension_numbers = #tpu.dot_dimension_numbers<[1], [0], [0], [1], [0, 0, 1, 1], [], []>} : vector<14x64xbf16>, vector<64x64xbf16>, vector<14x64xf32> -> vector<14x64xf32>
    %c0_46 = arith.constant 0 : index
    %c0_47 = arith.constant 0 : index
    %110 = vector.load %arg9[%c0_46, %c0_47] : memref<14x2xf32, #tpu.memory_space<vmem>>, vector<14x2xf32>
    %111 = vector.extract_strided_slice %110 {offsets = [0, 0], sizes = [14, 1], strides = [1, 1]} : vector<14x2xf32> to vector<14x1xf32>
    %112 = vector.extract_strided_slice %110 {offsets = [0, 1], sizes = [14, 1], strides = [1, 1]} : vector<14x2xf32> to vector<14x1xf32>
    %113 = vector.extract_strided_slice %24 {offsets = [3, 0], sizes = [1, 64], strides = [1, 1]} : vector<6x64xf32> to vector<1x64xf32>
    %114 = vector.extract_strided_slice %25 {offsets = [3, 0], sizes = [1, 64], strides = [1, 1]} : vector<6x64xf32> to vector<1x64xf32>
    %115 = vector.broadcast %113 : vector<1x64xf32> to vector<14x64xf32>
    %116 = arith.mulf %109, %115 : vector<14x64xf32>
    %117 = vector.broadcast %114 : vector<1x64xf32> to vector<14x64xf32>
    %118 = arith.addf %116, %117 : vector<14x64xf32>
    %cst_48 = arith.constant 0.000000e+00 : f32
    %119 = vector.broadcast %cst_48 : f32 to vector<14x64xf32>
    %120 = arith.maximumf %118, %119 : vector<14x64xf32>
    %121 = vector.extract_strided_slice %120 {offsets = [13, 0], sizes = [1, 64], strides = [1, 1]} : vector<14x64xf32> to vector<1x64xf32>
    %122 = vector.extract_strided_slice %120 {offsets = [0, 0], sizes = [13, 64], strides = [1, 1]} : vector<14x64xf32> to vector<13x64xf32>
    %123 = tpu.concatenate %121, %122 in 0 : vector<1x64xf32>, vector<13x64xf32> -> vector<14x64xf32>
    %124 = vector.broadcast %111 : vector<14x1xf32> to vector<14x64xf32>
    %125 = arith.mulf %123, %124 : vector<14x64xf32>
    %126 = vector.extract_strided_slice %120 {offsets = [1, 0], sizes = [13, 64], strides = [1, 1]} : vector<14x64xf32> to vector<13x64xf32>
    %127 = vector.extract_strided_slice %120 {offsets = [0, 0], sizes = [1, 64], strides = [1, 1]} : vector<14x64xf32> to vector<1x64xf32>
    %128 = tpu.concatenate %126, %127 in 0 : vector<13x64xf32>, vector<1x64xf32> -> vector<14x64xf32>
    %129 = vector.broadcast %112 : vector<14x1xf32> to vector<14x64xf32>
    %130 = arith.mulf %128, %129 : vector<14x64xf32>
    %131 = arith.truncf %125 : vector<14x64xf32> to vector<14x64xbf16>
    %c6 = arith.constant 6 : index
    %c0_49 = arith.constant 0 : index
    %c0_50 = arith.constant 0 : index
    %132 = vector.load %arg6[%c6, %c0_49, %c0_50] : memref<12x64x64xbf16, #tpu.memory_space<vmem>>, vector<1x64x64xbf16>
    %133 = vector.shape_cast %132 : vector<1x64x64xbf16> to vector<64x64xbf16>
    %cst_51 = arith.constant dense<0.000000e+00> : vector<14x64xf32>
    %134 = tpu.matmul %131, %133, %cst_51 {dimension_numbers = #tpu.dot_dimension_numbers<[1], [0], [0], [1], [0, 0, 1, 1], [], []>} : vector<14x64xbf16>, vector<64x64xbf16>, vector<14x64xf32> -> vector<14x64xf32>
    %135 = arith.truncf %120 : vector<14x64xf32> to vector<14x64xbf16>
    %c7 = arith.constant 7 : index
    %c0_52 = arith.constant 0 : index
    %c0_53 = arith.constant 0 : index
    %136 = vector.load %arg6[%c7, %c0_52, %c0_53] : memref<12x64x64xbf16, #tpu.memory_space<vmem>>, vector<1x64x64xbf16>
    %137 = vector.shape_cast %136 : vector<1x64x64xbf16> to vector<64x64xbf16>
    %cst_54 = arith.constant dense<0.000000e+00> : vector<14x64xf32>
    %138 = tpu.matmul %135, %137, %cst_54 {dimension_numbers = #tpu.dot_dimension_numbers<[1], [0], [0], [1], [0, 0, 1, 1], [], []>} : vector<14x64xbf16>, vector<64x64xbf16>, vector<14x64xf32> -> vector<14x64xf32>
    %139 = arith.addf %134, %138 : vector<14x64xf32>
    %140 = arith.truncf %130 : vector<14x64xf32> to vector<14x64xbf16>
    %c8 = arith.constant 8 : index
    %c0_55 = arith.constant 0 : index
    %c0_56 = arith.constant 0 : index
    %141 = vector.load %arg6[%c8, %c0_55, %c0_56] : memref<12x64x64xbf16, #tpu.memory_space<vmem>>, vector<1x64x64xbf16>
    %142 = vector.shape_cast %141 : vector<1x64x64xbf16> to vector<64x64xbf16>
    %cst_57 = arith.constant dense<0.000000e+00> : vector<14x64xf32>
    %143 = tpu.matmul %140, %142, %cst_57 {dimension_numbers = #tpu.dot_dimension_numbers<[1], [0], [0], [1], [0, 0, 1, 1], [], []>} : vector<14x64xbf16>, vector<64x64xbf16>, vector<14x64xf32> -> vector<14x64xf32>
    %144 = arith.addf %139, %143 : vector<14x64xf32>
    %145 = arith.addf %109, %144 : vector<14x64xf32>
    %146 = vector.extract_strided_slice %24 {offsets = [4, 0], sizes = [1, 64], strides = [1, 1]} : vector<6x64xf32> to vector<1x64xf32>
    %147 = vector.extract_strided_slice %25 {offsets = [4, 0], sizes = [1, 64], strides = [1, 1]} : vector<6x64xf32> to vector<1x64xf32>
    %148 = vector.broadcast %146 : vector<1x64xf32> to vector<14x64xf32>
    %149 = arith.mulf %145, %148 : vector<14x64xf32>
    %150 = vector.broadcast %147 : vector<1x64xf32> to vector<14x64xf32>
    %151 = arith.addf %149, %150 : vector<14x64xf32>
    %cst_58 = arith.constant 0.000000e+00 : f32
    %152 = vector.broadcast %cst_58 : f32 to vector<14x64xf32>
    %153 = arith.maximumf %151, %152 : vector<14x64xf32>
    %154 = vector.extract_strided_slice %153 {offsets = [13, 0], sizes = [1, 64], strides = [1, 1]} : vector<14x64xf32> to vector<1x64xf32>
    %155 = vector.extract_strided_slice %153 {offsets = [0, 0], sizes = [13, 64], strides = [1, 1]} : vector<14x64xf32> to vector<13x64xf32>
    %156 = tpu.concatenate %154, %155 in 0 : vector<1x64xf32>, vector<13x64xf32> -> vector<14x64xf32>
    %157 = vector.broadcast %111 : vector<14x1xf32> to vector<14x64xf32>
    %158 = arith.mulf %156, %157 : vector<14x64xf32>
    %159 = vector.extract_strided_slice %153 {offsets = [1, 0], sizes = [13, 64], strides = [1, 1]} : vector<14x64xf32> to vector<13x64xf32>
    %160 = vector.extract_strided_slice %153 {offsets = [0, 0], sizes = [1, 64], strides = [1, 1]} : vector<14x64xf32> to vector<1x64xf32>
    %161 = tpu.concatenate %159, %160 in 0 : vector<13x64xf32>, vector<1x64xf32> -> vector<14x64xf32>
    %162 = vector.broadcast %112 : vector<14x1xf32> to vector<14x64xf32>
    %163 = arith.mulf %161, %162 : vector<14x64xf32>
    %164 = arith.truncf %158 : vector<14x64xf32> to vector<14x64xbf16>
    %c9 = arith.constant 9 : index
    %c0_59 = arith.constant 0 : index
    %c0_60 = arith.constant 0 : index
    %165 = vector.load %arg6[%c9, %c0_59, %c0_60] : memref<12x64x64xbf16, #tpu.memory_space<vmem>>, vector<1x64x64xbf16>
    %166 = vector.shape_cast %165 : vector<1x64x64xbf16> to vector<64x64xbf16>
    %cst_61 = arith.constant dense<0.000000e+00> : vector<14x64xf32>
    %167 = tpu.matmul %164, %166, %cst_61 {dimension_numbers = #tpu.dot_dimension_numbers<[1], [0], [0], [1], [0, 0, 1, 1], [], []>} : vector<14x64xbf16>, vector<64x64xbf16>, vector<14x64xf32> -> vector<14x64xf32>
    %168 = arith.truncf %153 : vector<14x64xf32> to vector<14x64xbf16>
    %c10 = arith.constant 10 : index
    %c0_62 = arith.constant 0 : index
    %c0_63 = arith.constant 0 : index
    %169 = vector.load %arg6[%c10, %c0_62, %c0_63] : memref<12x64x64xbf16, #tpu.memory_space<vmem>>, vector<1x64x64xbf16>
    %170 = vector.shape_cast %169 : vector<1x64x64xbf16> to vector<64x64xbf16>
    %cst_64 = arith.constant dense<0.000000e+00> : vector<14x64xf32>
    %171 = tpu.matmul %168, %170, %cst_64 {dimension_numbers = #tpu.dot_dimension_numbers<[1], [0], [0], [1], [0, 0, 1, 1], [], []>} : vector<14x64xbf16>, vector<64x64xbf16>, vector<14x64xf32> -> vector<14x64xf32>
    %172 = arith.addf %167, %171 : vector<14x64xf32>
    %173 = arith.truncf %163 : vector<14x64xf32> to vector<14x64xbf16>
    %c11 = arith.constant 11 : index
    %c0_65 = arith.constant 0 : index
    %c0_66 = arith.constant 0 : index
    %174 = vector.load %arg6[%c11, %c0_65, %c0_66] : memref<12x64x64xbf16, #tpu.memory_space<vmem>>, vector<1x64x64xbf16>
    %175 = vector.shape_cast %174 : vector<1x64x64xbf16> to vector<64x64xbf16>
    %cst_67 = arith.constant dense<0.000000e+00> : vector<14x64xf32>
    %176 = tpu.matmul %173, %175, %cst_67 {dimension_numbers = #tpu.dot_dimension_numbers<[1], [0], [0], [1], [0, 0, 1, 1], [], []>} : vector<14x64xbf16>, vector<64x64xbf16>, vector<14x64xf32> -> vector<14x64xf32>
    %177 = arith.addf %172, %176 : vector<14x64xf32>
    %178 = arith.addf %145, %177 : vector<14x64xf32>
    %179 = vector.extract_strided_slice %24 {offsets = [5, 0], sizes = [1, 64], strides = [1, 1]} : vector<6x64xf32> to vector<1x64xf32>
    %180 = vector.extract_strided_slice %25 {offsets = [5, 0], sizes = [1, 64], strides = [1, 1]} : vector<6x64xf32> to vector<1x64xf32>
    %181 = vector.broadcast %179 : vector<1x64xf32> to vector<14x64xf32>
    %182 = arith.mulf %178, %181 : vector<14x64xf32>
    %183 = vector.broadcast %180 : vector<1x64xf32> to vector<14x64xf32>
    %184 = arith.addf %182, %183 : vector<14x64xf32>
    %cst_68 = arith.constant 0.000000e+00 : f32
    %185 = vector.broadcast %cst_68 : f32 to vector<14x64xf32>
    %186 = arith.maximumf %184, %185 : vector<14x64xf32>
    %c0_69 = arith.constant 0 : index
    %c0_70 = arith.constant 0 : index
    %187 = vector.load %arg11[%c0_69, %c0_70] : memref<6x14xbf16, #tpu.memory_space<vmem>>, vector<6x14xbf16>
    %188 = arith.truncf %186 : vector<14x64xf32> to vector<14x64xbf16>
    %cst_71 = arith.constant dense<0.000000e+00> : vector<6x64xf32>
    %189 = tpu.matmul %187, %188, %cst_71 {dimension_numbers = #tpu.dot_dimension_numbers<[1], [0], [0], [1], [0, 0, 1, 1], [], []>} : vector<6x14xbf16>, vector<14x64xbf16>, vector<6x64xf32> -> vector<6x64xf32>
    %190 = arith.truncf %189 : vector<6x64xf32> to vector<6x64xbf16>
    %c1_72 = arith.constant 1 : index
    %c0_73 = arith.constant 0 : index
    %c0_74 = arith.constant 0 : index
    %191 = vector.load %arg7[%c1_72, %c0_73, %c0_74] : memref<2x64x64xbf16, #tpu.memory_space<vmem>>, vector<1x64x64xbf16>
    %192 = vector.shape_cast %191 : vector<1x64x64xbf16> to vector<64x64xbf16>
    %cst_75 = arith.constant dense<0.000000e+00> : vector<6x64xf32>
    %193 = tpu.matmul %190, %192, %cst_75 {dimension_numbers = #tpu.dot_dimension_numbers<[1], [0], [0], [1], [0, 0, 1, 1], [], []>} : vector<6x64xbf16>, vector<64x64xbf16>, vector<6x64xf32> -> vector<6x64xf32>
    %c0_76 = arith.constant 0 : index
    %c0_77 = arith.constant 0 : index
    %194 = vector.load %arg12[%c0_76, %c0_77] : memref<2x6xbf16, #tpu.memory_space<vmem>>, vector<2x6xbf16>
    %195 = arith.truncf %193 : vector<6x64xf32> to vector<6x64xbf16>
    %cst_78 = arith.constant dense<0.000000e+00> : vector<2x64xf32>
    %196 = tpu.matmul %194, %195, %cst_78 {dimension_numbers = #tpu.dot_dimension_numbers<[1], [0], [0], [1], [0, 0, 1, 1], [], []>} : vector<2x6xbf16>, vector<6x64xbf16>, vector<2x64xf32> -> vector<2x64xf32>
    %c0_79 = arith.constant 0 : index
    %c0_80 = arith.constant 0 : index
    %197 = vector.load %arg16[%c0_79, %c0_80] : memref<3x256xf32, #tpu.memory_space<vmem>>, vector<1x256xf32>
    %c1_81 = arith.constant 1 : index
    %c0_82 = arith.constant 0 : index
    %198 = vector.load %arg16[%c1_81, %c0_82] : memref<3x256xf32, #tpu.memory_space<vmem>>, vector<1x96xf32>
    %c2_83 = arith.constant 2 : index
    %c0_84 = arith.constant 0 : index
    %199 = vector.load %arg16[%c2_83, %c0_84] : memref<3x256xf32, #tpu.memory_space<vmem>>, vector<1x1xf32>
    %200 = arith.truncf %196 : vector<2x64xf32> to vector<2x64xbf16>
    %c0_85 = arith.constant 0 : index
    %c0_86 = arith.constant 0 : index
    %201 = vector.load %arg13[%c0_85, %c0_86] : memref<64x256xbf16, #tpu.memory_space<vmem>>, vector<64x256xbf16>
    %cst_87 = arith.constant dense<0.000000e+00> : vector<2x256xf32>
    %202 = tpu.matmul %200, %201, %cst_87 {dimension_numbers = #tpu.dot_dimension_numbers<[1], [0], [0], [1], [0, 0, 1, 1], [], []>} : vector<2x64xbf16>, vector<64x256xbf16>, vector<2x256xf32> -> vector<2x256xf32>
    %203 = vector.broadcast %197 : vector<1x256xf32> to vector<2x256xf32>
    %204 = arith.addf %202, %203 : vector<2x256xf32>
    %cst_88 = arith.constant 0.000000e+00 : f32
    %205 = vector.broadcast %cst_88 : f32 to vector<2x256xf32>
    %206 = arith.maximumf %204, %205 : vector<2x256xf32>
    %207 = arith.truncf %206 : vector<2x256xf32> to vector<2x256xbf16>
    %c0_89 = arith.constant 0 : index
    %c0_90 = arith.constant 0 : index
    %208 = vector.load %arg14[%c0_89, %c0_90] : memref<256x96xbf16, #tpu.memory_space<vmem>>, vector<256x96xbf16>
    %cst_91 = arith.constant dense<0.000000e+00> : vector<2x96xf32>
    %209 = tpu.matmul %207, %208, %cst_91 {dimension_numbers = #tpu.dot_dimension_numbers<[1], [0], [0], [1], [0, 0, 1, 1], [], []>} : vector<2x256xbf16>, vector<256x96xbf16>, vector<2x96xf32> -> vector<2x96xf32>
    %210 = vector.broadcast %198 : vector<1x96xf32> to vector<2x96xf32>
    %211 = arith.addf %209, %210 : vector<2x96xf32>
    %cst_92 = arith.constant 0.000000e+00 : f32
    %212 = vector.broadcast %cst_92 : f32 to vector<2x96xf32>
    %213 = arith.maximumf %211, %212 : vector<2x96xf32>
    %214 = arith.truncf %213 : vector<2x96xf32> to vector<2x96xbf16>
    %c0_93 = arith.constant 0 : index
    %c0_94 = arith.constant 0 : index
    %215 = vector.load %arg15[%c0_93, %c0_94] : memref<96x1xbf16, #tpu.memory_space<vmem>>, vector<96x1xbf16>
    %cst_95 = arith.constant dense<0.000000e+00> : vector<2x1xf32>
    %216 = tpu.matmul %214, %215, %cst_95 {dimension_numbers = #tpu.dot_dimension_numbers<[1], [0], [0], [1], [0, 0, 1, 1], [], []>} : vector<2x96xbf16>, vector<96x1xbf16>, vector<2x1xf32> -> vector<2x1xf32>
    %217 = vector.broadcast %199 : vector<1x1xf32> to vector<2x1xf32>
    %218 = arith.addf %216, %217 : vector<2x1xf32>
    %c0_96 = arith.constant 0 : index
    %c0_97 = arith.constant 0 : index
    %219 = vector.load %arg17[%c0_96, %c0_97] : memref<2x1xf32, #tpu.memory_space<vmem>>, vector<2x1xf32>
    tpu.vector_store %arg17[%c0_96, %c0_97], %218 {strides = array<i32>} : memref<2x1xf32, #tpu.memory_space<vmem>>, vector<2x1xf32>,
    return
  }
  func.func @transform_0(%arg0: i32) -> (i32, i32) {
    %c0_i32 = arith.constant 0 : i32
    %c0_i32_0 = arith.constant 0 : i32
    return %arg0, %c0_i32 : i32, i32
  }
  func.func @transform_1(%arg0: i32) -> (i32, i32, i32) {
    %c0_i32 = arith.constant 0 : i32
    %c0_i32_0 = arith.constant 0 : i32
    %c0_i32_1 = arith.constant 0 : i32
    %c0_i32_2 = arith.constant 0 : i32
    return %c0_i32, %c0_i32_0, %c0_i32_1 : i32, i32, i32
  }
  func.func @transform_2(%arg0: i32) -> (i32, i32) {
    %c0_i32 = arith.constant 0 : i32
    %c0_i32_0 = arith.constant 0 : i32
    %c0_i32_1 = arith.constant 0 : i32
    return %c0_i32, %c0_i32_0 : i32, i32
  }
  func.func @transform_3(%arg0: i32) -> (i32, i32) {
    %c0_i32 = arith.constant 0 : i32
    %c0_i32_0 = arith.constant 0 : i32
    %c0_i32_1 = arith.constant 0 : i32
    return %c0_i32, %c0_i32_0 : i32, i32
  }
  func.func @transform_4(%arg0: i32) -> (i32, i32) {
    %c0_i32 = arith.constant 0 : i32
    %c0_i32_0 = arith.constant 0 : i32
    %c0_i32_1 = arith.constant 0 : i32
    return %c0_i32, %c0_i32_0 : i32, i32
  }
  func.func @transform_5(%arg0: i32) -> (i32, i32, i32) {
    %c0_i32 = arith.constant 0 : i32
    %c0_i32_0 = arith.constant 0 : i32
    %c0_i32_1 = arith.constant 0 : i32
    %c0_i32_2 = arith.constant 0 : i32
    return %c0_i32, %c0_i32_0, %c0_i32_1 : i32, i32, i32
  }
  func.func @transform_6(%arg0: i32) -> (i32, i32, i32) {
    %c0_i32 = arith.constant 0 : i32
    %c0_i32_0 = arith.constant 0 : i32
    %c0_i32_1 = arith.constant 0 : i32
    %c0_i32_2 = arith.constant 0 : i32
    return %c0_i32, %c0_i32_0, %c0_i32_1 : i32, i32, i32
  }
  func.func @transform_7(%arg0: i32) -> (i32, i32) {
    %c0_i32 = arith.constant 0 : i32
    %c0_i32_0 = arith.constant 0 : i32
    %c0_i32_1 = arith.constant 0 : i32
    return %c0_i32, %c0_i32_0 : i32, i32
  }
  func.func @transform_8(%arg0: i32) -> (i32, i32) {
    %c0_i32 = arith.constant 0 : i32
    %c0_i32_0 = arith.constant 0 : i32
    %c0_i32_1 = arith.constant 0 : i32
    return %c0_i32, %c0_i32_0 : i32, i32
  }
  func.func @transform_9(%arg0: i32) -> (i32, i32) {
    %c0_i32 = arith.constant 0 : i32
    %c0_i32_0 = arith.constant 0 : i32
    %c0_i32_1 = arith.constant 0 : i32
    return %c0_i32, %c0_i32_0 : i32, i32
  }
  func.func @transform_10(%arg0: i32) -> (i32, i32) {
    %c0_i32 = arith.constant 0 : i32
    %c0_i32_0 = arith.constant 0 : i32
    %c0_i32_1 = arith.constant 0 : i32
    return %c0_i32, %c0_i32_0 : i32, i32
  }
  func.func @transform_11(%arg0: i32) -> (i32, i32) {
    %c0_i32 = arith.constant 0 : i32
    %c0_i32_0 = arith.constant 0 : i32
    %c0_i32_1 = arith.constant 0 : i32
    return %c0_i32, %c0_i32_0 : i32, i32
  }
  func.func @transform_12(%arg0: i32) -> (i32, i32) {
    %c0_i32 = arith.constant 0 : i32
    %c0_i32_0 = arith.constant 0 : i32
    %c0_i32_1 = arith.constant 0 : i32
    return %c0_i32, %c0_i32_0 : i32, i32
  }
  func.func @transform_13(%arg0: i32) -> (i32, i32) {
    %c0_i32 = arith.constant 0 : i32
    %c0_i32_0 = arith.constant 0 : i32
    %c0_i32_1 = arith.constant 0 : i32
    return %c0_i32, %c0_i32_0 : i32, i32
  }
  func.func @transform_14(%arg0: i32) -> (i32, i32) {
    %c0_i32 = arith.constant 0 : i32
    %c0_i32_0 = arith.constant 0 : i32
    %c0_i32_1 = arith.constant 0 : i32
    return %c0_i32, %c0_i32_0 : i32, i32
  }
  func.func @transform_15(%arg0: i32) -> (i32, i32) {
    %c0_i32 = arith.constant 0 : i32
    %c0_i32_0 = arith.constant 0 : i32
    %c0_i32_1 = arith.constant 0 : i32
    return %c0_i32, %c0_i32_0 : i32, i32
  }
  func.func @transform_16(%arg0: i32) -> (i32, i32) {
    %c0_i32 = arith.constant 0 : i32
    %c0_i32_0 = arith.constant 0 : i32
    return %arg0, %c0_i32 : i32, i32
  }
}

</mosaic_0001>

<llo_original>
// kernel: tpu_custom_call.1
$region0: #{tpu_custom_call.1}
  #allocation0 [shape = 'u32[]', space=smem, size = 0x4, offset = 0x4, fixed_abs, tag = 'smem constant byte address 0x4 - core index']
  #allocation1 [shape = 'u32[144,128]{1,0:T(1,128)}', space=vmem, size = 0x12000, scoped, tag = 'internal scratch']
  %s0 = inlined_call_operand.vmem [shape: f32[64,8], index: 0, kind: input, shape index: {}]
  %s1 = inlined_call_operand.vmem [shape: bf16[2,8,64], index: 1, kind: input, shape index: {}]
  %s2 = inlined_call_operand.vmem [shape: bf16[30,64], index: 2, kind: input, shape index: {}]
  %s3 = inlined_call_operand.hbm [shape: f32[6,64], index: 3, kind: input, shape index: {}]
  %s4 = inlined_call_operand.hbm [shape: f32[6,64], index: 4, kind: input, shape index: {}]
  %s5 = inlined_call_operand.vmem [shape: bf16[12,64,64], index: 5, kind: input, shape index: {}]
  %s6 = inlined_call_operand.hbm [shape: bf16[2,64,64], index: 6, kind: input, shape index: {}]
  %s7 = inlined_call_operand.vmem [shape: f32[30,2], index: 7, kind: input, shape index: {}]
  %s8 = inlined_call_operand.vmem [shape: f32[14,2], index: 8, kind: input, shape index: {}]
  %s9 = inlined_call_operand.vmem [shape: bf16[14,30], index: 9, kind: input, shape index: {}]
  %s10 = inlined_call_operand.vmem [shape: bf16[6,14], index: 10, kind: input, shape index: {}]
  %s11 = inlined_call_operand.vmem [shape: bf16[2,6], index: 11, kind: input, shape index: {}]
  %s12 = inlined_call_operand.hbm [shape: bf16[64,256], index: 12, kind: input, shape index: {}]
  %s13 = inlined_call_operand.vmem [shape: bf16[256,96], index: 13, kind: input, shape index: {}]
  %s14 = inlined_call_operand.vmem [shape: bf16[96,1], index: 14, kind: input, shape index: {}]
  %s15 = inlined_call_operand.vmem [shape: f32[3,256], index: 15, kind: input, shape index: {}]
  %s16 = inlined_call_operand.vmem [shape: f32[2,1], index: 16, kind: output, shape index: {}]
  %s17 = sld [smem:[#allocation0]]
  $region90: #{tpu_custom_call.1} parent=0
    _
  %s19 = ssub.s32 1, %s17
  %s20 = scalar_select 0, %s19, %s17
  $region1: #{tpu_custom_call.1} parent=0
    #allocation2 [shape = 'u8[4096]{0}', space=vmem, size = 0x1000, scoped, tag = 'input window, operand 3, single buffered']
    #allocation3 [shape = 's32[1]{0}', space=sflag, size = 0x4, scoped, tag = 'scoped memory for tpu_custom_call.1']
    #allocation4 [shape = 'u8[4096]{0}', space=vmem, size = 0x1000, scoped, tag = 'input window, operand 4, single buffered']
    #allocation5 [shape = 's32[1]{0}', space=sflag, size = 0x4, scoped, tag = 'scoped memory for tpu_custom_call.1']
    #allocation6 [shape = 'u8[32768]{0}', space=vmem, size = 0x8000, scoped, tag = 'input window, operand 6, single buffered']
    #allocation7 [shape = 'u8[32768]{0}', space=vmem, size = 0x8000, scoped, tag = 'input window, operand 12, single buffered']
    #allocation8 [shape = 's32[1]{0}', space=sflag, size = 0x4, scoped, tag = 'scoped memory for tpu_custom_call.1']
    %21 = vsyncpa [#allocation3], 0
    %22 = vsyncpa [#allocation5], 0
    %23 = vsyncpa [#allocation8], 0
    // Predicated region
    $region2: #{tpu_custom_call.1} parent=1 // pred_check
      _
    $region3: #{tpu_custom_call.1} parent=1 // pred_check_branch
      %25 = sbr.rel (0) target = $region5
    $region4: #{tpu_custom_call.1} parent=1 // pred_region
      _
    $region5: #{tpu_custom_call.1} parent=1 // pred_fallthru
      _
    // Predicated region
    $region6: #{tpu_custom_call.1} parent=1 // pred_check
      _
    $region7: #{tpu_custom_call.1} parent=1 // pred_check_branch
      %27 = sbr.rel (0) target = $region9
    $region8: #{tpu_custom_call.1} parent=1 // pred_region
      _
    $region9: #{tpu_custom_call.1} parent=1 // pred_fallthru
      _
    // Predicated region
    $region10: #{tpu_custom_call.1} parent=1 // pred_check
      _
    $region11: #{tpu_custom_call.1} parent=1 // pred_check_branch
      %29 = sbr.rel (0) target = $region13
    $region12: #{tpu_custom_call.1} parent=1 // pred_region
      _
    $region13: #{tpu_custom_call.1} parent=1 // pred_fallthru
      _
    // Predicated region
    $region14: #{tpu_custom_call.1} parent=1 // pred_check
      _
    $region15: #{tpu_custom_call.1} parent=1 // pred_check_branch
      %31 = sbr.rel (0) target = $region17
    $region16: #{tpu_custom_call.1} parent=1 // pred_region
      %s33 = ssub.s32 128, 128
      %34 = vsyncadd [#allocation3], %s33
      %s36 = sshll.u32 [#allocation2], 4
      %s37 = int_to_ptr.vmem [resolvable:$true] %s36
      %39 = dma.hbm_to_vmem [thread:$0]  %s3, 128, %s37, [#allocation3]
    $region17: #{tpu_custom_call.1} parent=1 // pred_fallthru
      _
    // Predicated region
    $region18: #{tpu_custom_call.1} parent=1 // pred_check
      _
    $region19: #{tpu_custom_call.1} parent=1 // pred_check_branch
      %41 = sbr.rel (0) target = $region21
    $region20: #{tpu_custom_call.1} parent=1 // pred_region
      %s43 = ssub.s32 128, 128
      %44 = vsyncadd [#allocation5], %s43
      %s46 = sshll.u32 [#allocation4], 4
      %s47 = int_to_ptr.vmem [resolvable:$true] %s46
      %49 = dma.hbm_to_vmem [thread:$0]  %s4, 128, %s47, [#allocation5]
    $region21: #{tpu_custom_call.1} parent=1 // pred_fallthru
      _
    // Predicated region
    $region22: #{tpu_custom_call.1} parent=1 // pred_check
      _
    $region23: #{tpu_custom_call.1} parent=1 // pred_check_branch
      %51 = sbr.rel (0) target = $region25
    $region24: #{tpu_custom_call.1} parent=1 // pred_region
      _
    $region25: #{tpu_custom_call.1} parent=1 // pred_fallthru
      _
    // Predicated region
    $region26: #{tpu_custom_call.1} parent=1 // pred_check
      _
    $region27: #{tpu_custom_call.1} parent=1 // pred_check_branch
      %53 = sbr.rel (0) target = $region29
    $region28: #{tpu_custom_call.1} parent=1 // pred_region
      %s55 = ssub.s32 1024, 1024
      %56 = vsyncadd [#allocation5], %s55
      %s57 = sshll.u32 [#allocation6], 4
      %s58 = int_to_ptr.vmem [resolvable:$true] %s57
      %63 = dma.hbm_to_vmem [thread:$0]  %s6, 1024, %s58, [#allocation5], 64, 64, 4
    $region29: #{tpu_custom_call.1} parent=1 // pred_fallthru
      _
    // Predicated region
    $region30: #{tpu_custom_call.1} parent=1 // pred_check
      _
    $region31: #{tpu_custom_call.1} parent=1 // pred_check_branch
      %65 = sbr.rel (0) target = $region33
    $region32: #{tpu_custom_call.1} parent=1 // pred_region
      _
    $region33: #{tpu_custom_call.1} parent=1 // pred_fallthru
      _
    // Predicated region
    $region34: #{tpu_custom_call.1} parent=1 // pred_check
      _
    $region35: #{tpu_custom_call.1} parent=1 // pred_check_branch
      %67 = sbr.rel (0) target = $region37
    $region36: #{tpu_custom_call.1} parent=1 // pred_region
      _
    $region37: #{tpu_custom_call.1} parent=1 // pred_fallthru
      _
    // Predicated region
    $region38: #{tpu_custom_call.1} parent=1 // pred_check
      _
    $region39: #{tpu_custom_call.1} parent=1 // pred_check_branch
      %69 = sbr.rel (0) target = $region41
    $region40: #{tpu_custom_call.1} parent=1 // pred_region
      _
    $region41: #{tpu_custom_call.1} parent=1 // pred_fallthru
      _
    // Predicated region
    $region42: #{tpu_custom_call.1} parent=1 // pred_check
      _
    $region43: #{tpu_custom_call.1} parent=1 // pred_check_branch
      %71 = sbr.rel (0) target = $region45
    $region44: #{tpu_custom_call.1} parent=1 // pred_region
      _
    $region45: #{tpu_custom_call.1} parent=1 // pred_fallthru
      _
    // Predicated region
    $region46: #{tpu_custom_call.1} parent=1 // pred_check
      _
    $region47: #{tpu_custom_call.1} parent=1 // pred_check_branch
      %73 = sbr.rel (0) target = $region49
    $region48: #{tpu_custom_call.1} parent=1 // pred_region
      _
    $region49: #{tpu_custom_call.1} parent=1 // pred_fallthru
      _
    // Predicated region
    $region50: #{tpu_custom_call.1} parent=1 // pred_check
      _
    $region51: #{tpu_custom_call.1} parent=1 // pred_check_branch
      %75 = sbr.rel (0) target = $region53
    $region52: #{tpu_custom_call.1} parent=1 // pred_region
      %s77 = ssub.s32 1024, 1024
      %78 = vsyncadd [#allocation8], %s77
      %s79 = sshll.u32 [#allocation7], 4
      %s80 = int_to_ptr.vmem [resolvable:$true] %s79
      %85 = dma.hbm_to_vmem [thread:$0]  %s12, 1024, %s80, [#allocation8], 128, 128, 8
    $region53: #{tpu_custom_call.1} parent=1 // pred_fallthru
      _
    // Predicated region
    $region54: #{tpu_custom_call.1} parent=1 // pred_check
      _
    $region55: #{tpu_custom_call.1} parent=1 // pred_check_branch
      %87 = sbr.rel (0) target = $region57
    $region56: #{tpu_custom_call.1} parent=1 // pred_region
      _
    $region57: #{tpu_custom_call.1} parent=1 // pred_fallthru
      _
    // Predicated region
    $region58: #{tpu_custom_call.1} parent=1 // pred_check
      _
    $region59: #{tpu_custom_call.1} parent=1 // pred_check_branch
      %89 = sbr.rel (0) target = $region61
    $region60: #{tpu_custom_call.1} parent=1 // pred_region
      _
    $region61: #{tpu_custom_call.1} parent=1 // pred_fallthru
      _
    // Predicated region
    $region62: #{tpu_custom_call.1} parent=1 // pred_check
      _
    $region63: #{tpu_custom_call.1} parent=1 // pred_check_branch
      %91 = sbr.rel (0) target = $region65
    $region64: #{tpu_custom_call.1} parent=1 // pred_region
      _
    $region65: #{tpu_custom_call.1} parent=1 // pred_fallthru
      _
    // Predicated region
    $region66: #{tpu_custom_call.1} parent=1 // pred_check
      _
    $region67: #{tpu_custom_call.1} parent=1 // pred_check_branch
      %93 = sbr.rel (0) target = $region69
    $region68: #{tpu_custom_call.1} parent=1 // pred_region
      %94 = dma.done [#allocation3], 128
    $region69: #{tpu_custom_call.1} parent=1 // pred_fallthru
      _
    // Predicated region
    $region70: #{tpu_custom_call.1} parent=1 // pred_check
      _
    $region71: #{tpu_custom_call.1} parent=1 // pred_check_branch
      %96 = sbr.rel (0) target = $region73
    $region72: #{tpu_custom_call.1} parent=1 // pred_region
      %97 = dma.done [#allocation5], 128
    $region73: #{tpu_custom_call.1} parent=1 // pred_fallthru
      _
    // Predicated region
    $region74: #{tpu_custom_call.1} parent=1 // pred_check
      _
    $region75: #{tpu_custom_call.1} parent=1 // pred_check_branch
      %99 = sbr.rel (0) target = $region77
    $region76: #{tpu_custom_call.1} parent=1 // pred_region
      %100 = dma.done [#allocation5], 1024
    $region77: #{tpu_custom_call.1} parent=1 // pred_fallthru
      _
    // Predicated region
    $region78: #{tpu_custom_call.1} parent=1 // pred_check
      _
    $region79: #{tpu_custom_call.1} parent=1 // pred_check_branch
      %102 = sbr.rel (0) target = $region81
    $region80: #{tpu_custom_call.1} parent=1 // pred_region
      %103 = dma.done [#allocation8], 1024
    $region81: #{tpu_custom_call.1} parent=1 // pred_fallthru
      _
    %v105 = vld [vmem:[%s0] sm:$0xff]
    %v106 = vld [vmem:[%s0 + $0x8] sm:$0xff]
    %v107 = vld [vmem:[%s0 + $0x10] sm:$0xff]
    %v108 = vld [vmem:[%s0 + $0x18] sm:$0xff]
    %v109 = vld [vmem:[%s0 + $0x20] sm:$0xff]
    %v110 = vld [vmem:[%s0 + $0x28] sm:$0xff]
    %v111 = vld [vmem:[%s0 + $0x30] sm:$0xff]
    %v112 = vld [vmem:[%s0 + $0x38] sm:$0xff]
    %v113 = vpack.c.bf16 %v106, %v105
    %v114 = vpack.c.bf16 %v108, %v107
    %v115 = vpack.c.bf16 %v110, %v109
    %v116 = vpack.c.bf16 %v112, %v111
    %v117 = vld [vmem:[%s1] sm:$0xf]
    %vm126 = vcmask 1046528
    %v127 = vrot.slane %v105, 1
    %v128 = vrot.slane %v106, 1
    %v129 = vsel %vm126, %v127, %v128
    %v130 = vrot.slane %v107, 1
    %v131 = vsel %vm126, %v128, %v130
    %v132 = vrot.slane %v108, 1
    %v133 = vsel %vm126, %v130, %v132
    %v134 = vrot.slane %v109, 1
    %v135 = vsel %vm126, %v132, %v134
    %v136 = vrot.slane %v110, 1
    %v137 = vsel %vm126, %v134, %v136
    %v138 = vrot.slane %v111, 1
    %v139 = vsel %vm126, %v136, %v138
    %v140 = vrot.slane %v112, 1
    %v141 = vsel %vm126, %v138, %v140
    %v151 = vsel %vm126, %v140, %v127
    %v152 = vpack.c.bf16 %v131, %v129
    %v153 = vpack.c.bf16 %v135, %v133
    %v154 = vpack.c.bf16 %v139, %v137
    %v155 = vpack.c.bf16 %v151, %v141
    %s156 = scalar_lea.vmem %s1, 4
    %v157 = vld [vmem:[%s156] sm:$0xf]
    %vm158 = vcmask 64512
    %v160 = vsel %vm158, %v152, 0
    %v163 = vsel %vm158, %v153, 0
    %v166 = vsel %vm158, %v154, 0
    %v169 = vsel %vm158, %v155, 0
    %vm171 = vcmask 1043456
    %v173 = vsel %vm171, %v157, 0
    %175 = vmatprep.subr.bf16.mxu0 0
    %176 = vmatpush1.bf16.msra.mxu0 %v173
    %177 = vmatprep.subr.bf16.mxu0 0
    %178 = vmatpush1.bf16.msra.mxu0 0
    %179 = vmatprep.subr.bf16.mxu0 0
    %180 = vmatpush1.bf16.msra.mxu0 0
    %181 = vmatprep.subr.bf16.mxu0 0
    %182 = vmatpush1.bf16.msra.mxu0 0
    %183 = vmatprep.subr.bf16.mxu0 0
    %184 = vmatpush1.bf16.msra.mxu0 0
    %185 = vmatprep.subr.bf16.mxu0 0
    %186 = vmatpush1.bf16.msra.mxu0 0
    %187 = vmatprep.subr.bf16.mxu0 0
    %188 = vmatpush1.bf16.msra.mxu0 0
    %189 = vmatprep.subr.bf16.mxu0 0
    %190 = vmatpush1.bf16.msra.mxu0 0
    %191 = vmatprep.subr.bf16.mxu0 0
    %192 = vmatpush1.bf16.msra.mxu0 0
    %193 = vmatprep.subr.bf16.mxu0 0
    %194 = vmatpush1.bf16.msra.mxu0 0
    %195 = vmatprep.subr.bf16.mxu0 0
    %196 = vmatpush1.bf16.msra.mxu0 0
    %197 = vmatprep.subr.bf16.mxu0 0
    %198 = vmatpush1.bf16.msra.mxu0 0
    %199 = vmatprep.subr.bf16.mxu0 0
    %200 = vmatpush1.bf16.msra.mxu0 0
    %201 = vmatprep.subr.bf16.mxu0 0
    %202 = vmatpush1.bf16.msra.mxu0 0
    %203 = vmatprep.subr.bf16.mxu0 0
    %204 = vmatpush1.bf16.msra.mxu0 0
    %205 = vmatprep.subr.bf16.mxu0 0
    %206 = vmatpush1.bf16.msra.mxu0 0
    %207 = vmatprep.mubr.bf16.mxu0 0
    %208 = vmatmul.mubr.bf16.gmra.mrb[0].mxu0 %v160
    %v209 = vpop.f32.mrb[0].mxu0
    %v210 = vadd.f32 0.0, %v209
    %v211 = vpop.f32.mrb[0].mxu0
    %v212 = vpop.f32.mrb[0].mxu0
    %v213 = vadd.f32 0.0, %v212
    %v214 = vpop.f32.mrb[0].mxu0
    %215 = vmatprep.mubr.bf16.mxu0 0
    %216 = vmatmul.mubr.bf16.gmra.mrb[0].mxu0 %v163
    %v217 = vpop.f32.mrb[0].mxu0
    %v218 = vadd.f32 0.0, %v217
    %v219 = vpop.f32.mrb[0].mxu0
    %v220 = vpop.f32.mrb[0].mxu0
    %v221 = vadd.f32 0.0, %v220
    %v222 = vpop.f32.mrb[0].mxu0
    %223 = vmatprep.mubr.bf16.mxu0 0
    %224 = vmatmul.mubr.bf16.gmra.mrb[0].mxu0 %v166
    %v225 = vpop.f32.mrb[0].mxu0
    %v226 = vadd.f32 0.0, %v225
    %v227 = vpop.f32.mrb[0].mxu0
    %v228 = vpop.f32.mrb[0].mxu0
    %v229 = vadd.f32 0.0, %v228
    %v230 = vpop.f32.mrb[0].mxu0
    %231 = vmatprep.mubr.bf16.mxu0 0
    %232 = vmatmul.mubr.bf16.gmra.mrb[0].mxu0 %v169
    %v233 = vpop.f32.mrb[0].mxu0
    %v234 = vadd.f32 0.0, %v233
    %v235 = vpop.f32.mrb[0].mxu0
    %v236 = vpop.f32.mrb[0].mxu0
    %v237 = vadd.f32 0.0, %v236
    %v238 = vpop.f32.mrb[0].mxu0
    %239 = vdwg.mxu0
    %v241 = vsel %vm158, %v113, 0
    %v244 = vsel %vm158, %v114, 0
    %v247 = vsel %vm158, %v115, 0
    %v250 = vsel %vm158, %v116, 0
    %v253 = vsel %vm171, %v117, 0
    %255 = vmatprep.subr.bf16.mxu0 0
    %256 = vmatpush1.bf16.msra.mxu0 %v253
    %257 = vmatprep.subr.bf16.mxu0 0
    %258 = vmatpush1.bf16.msra.mxu0 0
    %259 = vmatprep.subr.bf16.mxu0 0
    %260 = vmatpush1.bf16.msra.mxu0 0
    %261 = vmatprep.subr.bf16.mxu0 0
    %262 = vmatpush1.bf16.msra.mxu0 0
    %263 = vmatprep.subr.bf16.mxu0 0
    %264 = vmatpush1.bf16.msra.mxu0 0
    %265 = vmatprep.subr.bf16.mxu0 0
    %266 = vmatpush1.bf16.msra.mxu0 0
    %267 = vmatprep.subr.bf16.mxu0 0
    %268 = vmatpush1.bf16.msra.mxu0 0
    %269 = vmatprep.subr.bf16.mxu0 0
    %270 = vmatpush1.bf16.msra.mxu0 0
    %271 = vmatprep.subr.bf16.mxu0 0
    %272 = vmatpush1.bf16.msra.mxu0 0
    %273 = vmatprep.subr.bf16.mxu0 0
    %274 = vmatpush1.bf16.msra.mxu0 0
    %275 = vmatprep.subr.bf16.mxu0 0
    %276 = vmatpush1.bf16.msra.mxu0 0
    %277 = vmatprep.subr.bf16.mxu0 0
    %278 = vmatpush1.bf16.msra.mxu0 0
    %279 = vmatprep.subr.bf16.mxu0 0
    %280 = vmatpush1.bf16.msra.mxu0 0
    %281 = vmatprep.subr.bf16.mxu0 0
    %282 = vmatpush1.bf16.msra.mxu0 0
    %283 = vmatprep.subr.bf16.mxu0 0
    %284 = vmatpush1.bf16.msra.mxu0 0
    %285 = vmatprep.subr.bf16.mxu0 0
    %286 = vmatpush1.bf16.msra.mxu0 0
    %287 = vmatprep.mubr.bf16.mxu0 0
    %288 = vmatmul.mubr.bf16.gmra.mrb[0].mxu0 %v241
    %v289 = vpop.f32.mrb[0].mxu0
    %v290 = vadd.f32 %v210, %v289
    %v291 = vpop.f32.mrb[0].mxu0
    %v292 = vpop.f32.mrb[0].mxu0
    %v293 = vadd.f32 %v213, %v292
    %v294 = vpop.f32.mrb[0].mxu0
    %295 = vmatprep.mubr.bf16.mxu0 0
    %296 = vmatmul.mubr.bf16.gmra.mrb[0].mxu0 %v244
    %v297 = vpop.f32.mrb[0].mxu0
    %v298 = vadd.f32 %v218, %v297
    %v299 = vpop.f32.mrb[0].mxu0
    %v300 = vpop.f32.mrb[0].mxu0
    %v301 = vadd.f32 %v221, %v300
    %v302 = vpop.f32.mrb[0].mxu0
    %303 = vmatprep.mubr.bf16.mxu0 0
    %304 = vmatmul.mubr.bf16.gmra.mrb[0].mxu0 %v247
    %v305 = vpop.f32.mrb[0].mxu0
    %v306 = vadd.f32 %v226, %v305
    %v307 = vpop.f32.mrb[0].mxu0
    %v308 = vpop.f32.mrb[0].mxu0
    %v309 = vadd.f32 %v229, %v308
    %v310 = vpop.f32.mrb[0].mxu0
    %311 = vmatprep.mubr.bf16.mxu0 0
    %312 = vmatmul.mubr.bf16.gmra.mrb[0].mxu0 %v250
    %v313 = vpop.f32.mrb[0].mxu0
    %v314 = vadd.f32 %v234, %v313
    %v315 = vpop.f32.mrb[0].mxu0
    %v316 = vpop.f32.mrb[0].mxu0
    %v317 = vadd.f32 %v237, %v316
    %v318 = vpop.f32.mrb[0].mxu0
    %319 = vdwg.mxu0
    %v328 = vrot.slane %v290, 1
    %v329 = vrot.slane %v293, 1
    %v330 = vsel %vm126, %v328, %v329
    %v331 = vrot.slane %v298, 1
    %v332 = vsel %vm126, %v329, %v331
    %v333 = vrot.slane %v301, 1
    %v334 = vsel %vm126, %v331, %v333
    %v335 = vrot.slane %v306, 1
    %v336 = vsel %vm126, %v333, %v335
    %v337 = vrot.slane %v309, 1
    %v338 = vsel %vm126, %v335, %v337
    %v339 = vrot.slane %v314, 1
    %v340 = vsel %vm126, %v337, %v339
    %v341 = vrot.slane %v317, 1
    %v342 = vsel %vm126, %v339, %v341
    %v352 = vsel %vm126, %v341, %v328
    %v353 = vmax.f32 %v290, %v330
    %v354 = vmax.f32 %v293, %v332
    %v355 = vmax.f32 %v298, %v334
    %v356 = vmax.f32 %v301, %v336
    %v357 = vmax.f32 %v306, %v338
    %v358 = vmax.f32 %v309, %v340
    %v359 = vmax.f32 %v314, %v342
    %v360 = vmax.f32 %v317, %v352
    %vm361 = vcmask 1045504
    %v362 = vrot.slane %v290, 2
    %v363 = vrot.slane %v293, 2
    %v364 = vsel %vm361, %v362, %v363
    %v365 = vrot.slane %v298, 2
    %v366 = vsel %vm361, %v363, %v365
    %v367 = vrot.slane %v301, 2
    %v368 = vsel %vm361, %v365, %v367
    %v369 = vrot.slane %v306, 2
    %v370 = vsel %vm361, %v367, %v369
    %v371 = vrot.slane %v309, 2
    %v372 = vsel %vm361, %v369, %v371
    %v373 = vrot.slane %v314, 2
    %v374 = vsel %vm361, %v371, %v373
    %v375 = vrot.slane %v317, 2
    %v376 = vsel %vm361, %v373, %v375
    %v386 = vsel %vm361, %v375, %v362
    %v387 = vmax.f32 %v353, %v364
    %v388 = vmax.f32 %v354, %v366
    %v389 = vmax.f32 %v355, %v368
    %v390 = vmax.f32 %v356, %v370
    %v391 = vmax.f32 %v357, %v372
    %v392 = vmax.f32 %v358, %v374
    %v393 = vmax.f32 %v359, %v376
    %v394 = vmax.f32 %v360, %v386
    %v395 = vld [vmem:[%s2] sm:$0xf]
    %v396 = vld [vmem:[%s2 + $0x4] sm:$0xf]
    %v397 = vld [vmem:[%s2 + $0x8] sm:$0xf]
    %v398 = vld [vmem:[%s2 + $0xc] sm:$0x7]
    %v399 = vpack.c.bf16 %v388, %v387
    %v400 = vpack.c.bf16 %v390, %v389
    %v401 = vpack.c.bf16 %v392, %v391
    %v402 = vpack.c.bf16 %v394, %v393
    %v407 = vunpack.c.l.b16 %v395
    %v408 = vunpack.c.l.b16 %v396
    %v409 = vunpack.c.l.b16 %v397
    %v410 = vunpack.c.l.b16 %v398
    %v411 = vpack.c.b16 %v408, %v407
    %v412 = vpack.c.b16 %v410, %v409
    %vm413 = vcmask 523264
    %v415 = vsel %vm413, %v411, 0
    %v418 = vsel %vm413, %v412, 0
    %420 = vmatprep.subr.bf16.mxu0 0
    %421 = vmatpush1.bf16.msra.mxu0 %v399
    %422 = vmatprep.subr.bf16.mxu0 0
    %423 = vmatpush1.bf16.msra.mxu0 %v400
    %424 = vmatprep.subr.bf16.mxu0 0
    %425 = vmatpush1.bf16.msra.mxu0 %v401
    %426 = vmatprep.subr.bf16.mxu0 0
    %427 = vmatpush1.bf16.msra.mxu0 %v402
    %428 = vmatprep.subr.bf16.mxu0 0
    %429 = vmatpush1.bf16.msra.mxu0 0
    %430 = vmatprep.subr.bf16.mxu0 0
    %431 = vmatpush1.bf16.msra.mxu0 0
    %432 = vmatprep.subr.bf16.mxu0 0
    %433 = vmatpush1.bf16.msra.mxu0 0
    %434 = vmatprep.subr.bf16.mxu0 0
    %435 = vmatpush1.bf16.msra.mxu0 0
    %436 = vmatprep.subr.bf16.mxu0 0
    %437 = vmatpush1.bf16.msra.mxu0 0
    %438 = vmatprep.subr.bf16.mxu0 0
    %439 = vmatpush1.bf16.msra.mxu0 0
    %440 = vmatprep.subr.bf16.mxu0 0
    %441 = vmatpush1.bf16.msra.mxu0 0
    %442 = vmatprep.subr.bf16.mxu0 0
    %443 = vmatpush1.bf16.msra.mxu0 0
    %444 = vmatprep.subr.bf16.mxu0 0
    %445 = vmatpush1.bf16.msra.mxu0 0
    %446 = vmatprep.subr.bf16.mxu0 0
    %447 = vmatpush1.bf16.msra.mxu0 0
    %448 = vmatprep.subr.bf16.mxu0 0
    %449 = vmatpush1.bf16.msra.mxu0 0
    %450 = vmatprep.subr.bf16.mxu0 0
    %451 = vmatpush1.bf16.msra.mxu0 0
    %452 = vmatprep.mubr.bf16.mxu0 0
    %453 = vmatmul.mubr.bf16.gmra.mrb[0].mxu0 %v415
    %v454 = vpop.f32.mrb[0].mxu0
    %v455 = vadd.f32 0.0, %v454
    %v456 = vpop.f32.mrb[0].mxu0
    %v457 = vpop.f32.mrb[0].mxu0
    %v458 = vadd.f32 0.0, %v457
    %v459 = vpop.f32.mrb[0].mxu0
    %460 = vmatprep.mubr.bf16.mxu0 0
    %461 = vmatmul.mubr.bf16.gmra.mrb[0].mxu0 %v418
    %v462 = vpop.f32.mrb[0].mxu0
    %v463 = vadd.f32 0.0, %v462
    %v464 = vpop.f32.mrb[0].mxu0
    %v465 = vpop.f32.mrb[0].mxu0
    %v466 = vadd.f32 0.0, %v465
    %v467 = vpop.f32.mrb[0].mxu0
    %468 = vdwg.mxu0
    %v469 = vld [vmem:[#allocation2] sm:$0x3f]
    %v470 = vld [vmem:[#allocation4] sm:$0x3f]
    %v471 = vld [vmem:[%s7] sm:$0xff]
    %v472 = vld [vmem:[%s7 + $0x8] sm:$0xff]
    %v473 = vld [vmem:[%s7 + $0x10] sm:$0xff]
    %v474 = vld [vmem:[%s7 + $0x18] sm:$0x3f]
    %v475 = vlaneseq
    %v476 = vshrl.u32 %v475, 7
    %v477 = vsub.s32 0, %v476
    %v478 = vrot.slane %v469, %v477
    %v479 = vmul.f32 %v455, %v478
    %v480 = vmul.f32 %v458, %v478
    %v481 = vmul.f32 %v463, %v478
    %v482 = vmul.f32 %v466, %v478
    %v483 = vlaneseq
    %v484 = vshrl.u32 %v483, 7
    %v485 = vsub.s32 0, %v484
    %v486 = vrot.slane %v470, %v485
    %v487 = vadd.f32 %v479, %v486
    %v488 = vadd.f32 %v480, %v486
    %v489 = vadd.f32 %v481, %v486
    %v490 = vadd.f32 %v482, %v486
    %v491 = vmax.f32 %v487, 0.0
    %v492 = vmax.f32 %v488, 0.0
    %v493 = vmax.f32 %v489, 0.0
    %v494 = vmax.f32 %v490, 0.0
    %v496 = vrot.slane %v494, 5
    %vm501 = vcmask 1040384
    %v502 = vrot.slane %v491, 7
    %v503 = vrot.slane %v492, 7
    %v504 = vsel %vm501, %v502, %v503
    %v505 = vrot.slane %v493, 7
    %v506 = vsel %vm501, %v503, %v505
    %v507 = vrot.slane %v494, 7
    %v508 = vsel %vm501, %v505, %v507
    %v513 = vsel %vm501, %v496, %v502
    %515 = vset.pattern.permute.xlu0 0
    %516 = vperm.xlu0 %515, %v471
    %v517 = vpop.permute.xlu0 %516
    %520 = vset.pattern.permute.xlu0 0
    %521 = vperm.xlu0 %520, %v472
    %v522 = vpop.permute.xlu0 %521
    %525 = vset.pattern.permute.xlu0 0
    %526 = vperm.xlu0 %525, %v473
    %v527 = vpop.permute.xlu0 %526
    %530 = vset.pattern.permute.xlu0 0
    %531 = vperm.xlu0 %530, %v474
    %v532 = vpop.permute.xlu0 %531
    %v534 = vmul.f32 %v513, %v517
    %v535 = vmul.f32 %v504, %v522
    %v536 = vmul.f32 %v506, %v527
    %v537 = vmul.f32 %v508, %v532
    %v538 = vrot.slane %v491, 1
    %v539 = vrot.slane %v492, 1
    %v540 = vsel %vm126, %v538, %v539
    %v541 = vrot.slane %v493, 1
    %v542 = vsel %vm126, %v539, %v541
    %v543 = vrot.slane %v494, 1
    %v544 = vsel %vm126, %v541, %v543
    %v549 = vrot.slane %v491, 3
    %vm551 = vcmask 1044480
    %v552 = vsel %vm551, %v543, %v549
    %553 = vset.pattern.permute.xlu0 1
    %554 = vperm.xlu0 %553, %v471
    %v555 = vpop.permute.xlu0 %554
    %557 = vset.pattern.permute.xlu0 1
    %558 = vperm.xlu0 %557, %v472
    %v559 = vpop.permute.xlu0 %558
    %561 = vset.pattern.permute.xlu0 1
    %562 = vperm.xlu0 %561, %v473
    %v563 = vpop.permute.xlu0 %562
    %565 = vset.pattern.permute.xlu0 1
    %566 = vperm.xlu0 %565, %v474
    %v567 = vpop.permute.xlu0 %566
    %v569 = vmul.f32 %v540, %v555
    %v570 = vmul.f32 %v542, %v559
    %v571 = vmul.f32 %v544, %v563
    %v572 = vmul.f32 %v552, %v567
    %v573 = vpack.c.bf16 %v535, %v534
    %v574 = vpack.c.bf16 %v537, %v536
    %v575 = vld [vmem:[%s5] sm:$0xf]
    %v576 = vld [vmem:[%s5 + $0x4] sm:$0xf]
    %v577 = vld [vmem:[%s5 + $0x8] sm:$0xf]
    %v578 = vld [vmem:[%s5 + $0xc] sm:$0xf]
    %v579 = vld [vmem:[%s5 + $0x10] sm:$0xf]
    %v580 = vld [vmem:[%s5 + $0x14] sm:$0xf]
    %v581 = vld [vmem:[%s5 + $0x18] sm:$0xf]
    %v582 = vld [vmem:[%s5 + $0x1c] sm:$0xf]
    %v583 = vpack.c.bf16 %v492, %v491
    %v584 = vpack.c.bf16 %v494, %v493
    %s585 = scalar_lea.vmem %s5, 32
    %v586 = vld [vmem:[%s585] sm:$0xf]
    %v587 = vld [vmem:[%s585 + $0x4] sm:$0xf]
    %v588 = vld [vmem:[%s585 + $0x8] sm:$0xf]
    %v589 = vld [vmem:[%s585 + $0xc] sm:$0xf]
    %v590 = vld [vmem:[%s585 + $0x10] sm:$0xf]
    %v591 = vld [vmem:[%s585 + $0x14] sm:$0xf]
    %v592 = vld [vmem:[%s585 + $0x18] sm:$0xf]
    %v593 = vld [vmem:[%s585 + $0x1c] sm:$0xf]
    %v602 = vunpack.c.l.b16 %v586
    %v603 = vunpack.c.l.b16 %v587
    %v604 = vunpack.c.l.b16 %v588
    %v605 = vunpack.c.l.b16 %v589
    %v606 = vunpack.c.l.b16 %v590
    %v607 = vunpack.c.l.b16 %v591
    %v608 = vunpack.c.l.b16 %v592
    %v609 = vunpack.c.l.b16 %v593
    %v610 = vpack.c.b16 %v603, %v602
    %v611 = vpack.c.b16 %v605, %v604
    %v612 = vpack.c.b16 %v607, %v606
    %v613 = vpack.c.b16 %v609, %v608
    %v619 = vsel %vm413, %v583, 0
    %v622 = vsel %vm413, %v584, 0
    %624 = vmatprep.subr.bf16.mxu0 0
    %625 = vmatpush1.bf16.msra.mxu0 %v610
    %626 = vmatprep.subr.bf16.mxu0 0
    %627 = vmatpush1.bf16.msra.mxu0 %v611
    %628 = vmatprep.subr.bf16.mxu0 0
    %629 = vmatpush1.bf16.msra.mxu0 %v612
    %630 = vmatprep.subr.bf16.mxu0 0
    %631 = vmatpush1.bf16.msra.mxu0 %v613
    %632 = vmatprep.subr.bf16.mxu0 0
    %633 = vmatpush1.bf16.msra.mxu0 0
    %634 = vmatprep.subr.bf16.mxu0 0
    %635 = vmatpush1.bf16.msra.mxu0 0
    %636 = vmatprep.subr.bf16.mxu0 0
    %637 = vmatpush1.bf16.msra.mxu0 0
    %638 = vmatprep.subr.bf16.mxu0 0
    %639 = vmatpush1.bf16.msra.mxu0 0
    %640 = vmatprep.subr.bf16.mxu0 0
    %641 = vmatpush1.bf16.msra.mxu0 0
    %642 = vmatprep.subr.bf16.mxu0 0
    %643 = vmatpush1.bf16.msra.mxu0 0
    %644 = vmatprep.subr.bf16.mxu0 0
    %645 = vmatpush1.bf16.msra.mxu0 0
    %646 = vmatprep.subr.bf16.mxu0 0
    %647 = vmatpush1.bf16.msra.mxu0 0
    %648 = vmatprep.subr.bf16.mxu0 0
    %649 = vmatpush1.bf16.msra.mxu0 0
    %650 = vmatprep.subr.bf16.mxu0 0
    %651 = vmatpush1.bf16.msra.mxu0 0
    %652 = vmatprep.subr.bf16.mxu0 0
    %653 = vmatpush1.bf16.msra.mxu0 0
    %654 = vmatprep.subr.bf16.mxu0 0
    %655 = vmatpush1.bf16.msra.mxu0 0
    %656 = vmatprep.mubr.bf16.mxu0 0
    %657 = vmatmul.mubr.bf16.gmra.mrb[0].mxu0 %v619
    %v658 = vpop.f32.mrb[0].mxu0
    %v659 = vadd.f32 0.0, %v658
    %v660 = vpop.f32.mrb[0].mxu0
    %v661 = vpop.f32.mrb[0].mxu0
    %v662 = vadd.f32 0.0, %v661
    %v663 = vpop.f32.mrb[0].mxu0
    %664 = vmatprep.mubr.bf16.mxu0 0
    %665 = vmatmul.mubr.bf16.gmra.mrb[0].mxu0 %v622
    %v666 = vpop.f32.mrb[0].mxu0
    %v667 = vadd.f32 0.0, %v666
    %v668 = vpop.f32.mrb[0].mxu0
    %v669 = vpop.f32.mrb[0].mxu0
    %v670 = vadd.f32 0.0, %v669
    %v671 = vpop.f32.mrb[0].mxu0
    %672 = vdwg.mxu0
    %v681 = vunpack.c.l.b16 %v575
    %v682 = vunpack.c.l.b16 %v576
    %v683 = vunpack.c.l.b16 %v577
    %v684 = vunpack.c.l.b16 %v578
    %v685 = vunpack.c.l.b16 %v579
    %v686 = vunpack.c.l.b16 %v580
    %v687 = vunpack.c.l.b16 %v581
    %v688 = vunpack.c.l.b16 %v582
    %v689 = vpack.c.b16 %v682, %v681
    %v690 = vpack.c.b16 %v684, %v683
    %v691 = vpack.c.b16 %v686, %v685
    %v692 = vpack.c.b16 %v688, %v687
    %v698 = vsel %vm413, %v573, 0
    %v701 = vsel %vm413, %v574, 0
    %703 = vmatprep.subr.bf16.mxu0 0
    %704 = vmatpush1.bf16.msra.mxu0 %v689
    %705 = vmatprep.subr.bf16.mxu0 0
    %706 = vmatpush1.bf16.msra.mxu0 %v690
    %707 = vmatprep.subr.bf16.mxu0 0
    %708 = vmatpush1.bf16.msra.mxu0 %v691
    %709 = vmatprep.subr.bf16.mxu0 0
    %710 = vmatpush1.bf16.msra.mxu0 %v692
    %711 = vmatprep.subr.bf16.mxu0 0
    %712 = vmatpush1.bf16.msra.mxu0 0
    %713 = vmatprep.subr.bf16.mxu0 0
    %714 = vmatpush1.bf16.msra.mxu0 0
    %715 = vmatprep.subr.bf16.mxu0 0
    %716 = vmatpush1.bf16.msra.mxu0 0
    %717 = vmatprep.subr.bf16.mxu0 0
    %718 = vmatpush1.bf16.msra.mxu0 0
    %719 = vmatprep.subr.bf16.mxu0 0
    %720 = vmatpush1.bf16.msra.mxu0 0
    %721 = vmatprep.subr.bf16.mxu0 0
    %722 = vmatpush1.bf16.msra.mxu0 0
    %723 = vmatprep.subr.bf16.mxu0 0
    %724 = vmatpush1.bf16.msra.mxu0 0
    %725 = vmatprep.subr.bf16.mxu0 0
    %726 = vmatpush1.bf16.msra.mxu0 0
    %727 = vmatprep.subr.bf16.mxu0 0
    %728 = vmatpush1.bf16.msra.mxu0 0
    %729 = vmatprep.subr.bf16.mxu0 0
    %730 = vmatpush1.bf16.msra.mxu0 0
    %731 = vmatprep.subr.bf16.mxu0 0
    %732 = vmatpush1.bf16.msra.mxu0 0
    %733 = vmatprep.subr.bf16.mxu0 0
    %734 = vmatpush1.bf16.msra.mxu0 0
    %735 = vmatprep.mubr.bf16.mxu0 0
    %736 = vmatmul.mubr.bf16.gmra.mrb[0].mxu0 %v698
    %v737 = vpop.f32.mrb[0].mxu0
    %v738 = vadd.f32 %v659, %v737
    %v739 = vpop.f32.mrb[0].mxu0
    %v740 = vpop.f32.mrb[0].mxu0
    %v741 = vadd.f32 %v662, %v740
    %v742 = vpop.f32.mrb[0].mxu0
    %743 = vmatprep.mubr.bf16.mxu0 0
    %744 = vmatmul.mubr.bf16.gmra.mrb[0].mxu0 %v701
    %v745 = vpop.f32.mrb[0].mxu0
    %v746 = vadd.f32 %v667, %v745
    %v747 = vpop.f32.mrb[0].mxu0
    %v748 = vpop.f32.mrb[0].mxu0
    %v749 = vadd.f32 %v670, %v748
    %v750 = vpop.f32.mrb[0].mxu0
    %751 = vdwg.mxu0
    %v752 = vpack.c.bf16 %v570, %v569
    %v753 = vpack.c.bf16 %v572, %v571
    %s754 = scalar_lea.vmem %s5, 64
    %v755 = vld [vmem:[%s754] sm:$0xf]
    %v756 = vld [vmem:[%s754 + $0x4] sm:$0xf]
    %v757 = vld [vmem:[%s754 + $0x8] sm:$0xf]
    %v758 = vld [vmem:[%s754 + $0xc] sm:$0xf]
    %v759 = vld [vmem:[%s754 + $0x10] sm:$0xf]
    %v760 = vld [vmem:[%s754 + $0x14] sm:$0xf]
    %v761 = vld [vmem:[%s754 + $0x18] sm:$0xf]
    %v762 = vld [vmem:[%s754 + $0x1c] sm:$0xf]
    %v771 = vunpack.c.l.b16 %v755
    %v772 = vunpack.c.l.b16 %v756
    %v773 = vunpack.c.l.b16 %v757
    %v774 = vunpack.c.l.b16 %v758
    %v775 = vunpack.c.l.b16 %v759
    %v776 = vunpack.c.l.b16 %v760
    %v777 = vunpack.c.l.b16 %v761
    %v778 = vunpack.c.l.b16 %v762
    %v779 = vpack.c.b16 %v772, %v771
    %v780 = vpack.c.b16 %v774, %v773
    %v781 = vpack.c.b16 %v776, %v775
    %v782 = vpack.c.b16 %v778, %v777
    %v788 = vsel %vm413, %v752, 0
    %v791 = vsel %vm413, %v753, 0
    %793 = vmatprep.subr.bf16.mxu0 0
    %794 = vmatpush1.bf16.msra.mxu0 %v779
    %795 = vmatprep.subr.bf16.mxu0 0
    %796 = vmatpush1.bf16.msra.mxu0 %v780
    %797 = vmatprep.subr.bf16.mxu0 0
    %798 = vmatpush1.bf16.msra.mxu0 %v781
    %799 = vmatprep.subr.bf16.mxu0 0
    %800 = vmatpush1.bf16.msra.mxu0 %v782
    %801 = vmatprep.subr.bf16.mxu0 0
    %802 = vmatpush1.bf16.msra.mxu0 0
    %803 = vmatprep.subr.bf16.mxu0 0
    %804 = vmatpush1.bf16.msra.mxu0 0
    %805 = vmatprep.subr.bf16.mxu0 0
    %806 = vmatpush1.bf16.msra.mxu0 0
    %807 = vmatprep.subr.bf16.mxu0 0
    %808 = vmatpush1.bf16.msra.mxu0 0
    %809 = vmatprep.subr.bf16.mxu0 0
    %810 = vmatpush1.bf16.msra.mxu0 0
    %811 = vmatprep.subr.bf16.mxu0 0
    %812 = vmatpush1.bf16.msra.mxu0 0
    %813 = vmatprep.subr.bf16.mxu0 0
    %814 = vmatpush1.bf16.msra.mxu0 0
    %815 = vmatprep.subr.bf16.mxu0 0
    %816 = vmatpush1.bf16.msra.mxu0 0
    %817 = vmatprep.subr.bf16.mxu0 0
    %818 = vmatpush1.bf16.msra.mxu0 0
    %819 = vmatprep.subr.bf16.mxu0 0
    %820 = vmatpush1.bf16.msra.mxu0 0
    %821 = vmatprep.subr.bf16.mxu0 0
    %822 = vmatpush1.bf16.msra.mxu0 0
    %823 = vmatprep.subr.bf16.mxu0 0
    %824 = vmatpush1.bf16.msra.mxu0 0
    %825 = vmatprep.mubr.bf16.mxu0 0
    %826 = vmatmul.mubr.bf16.gmra.mrb[0].mxu0 %v788
    %v827 = vpop.f32.mrb[0].mxu0
    %v828 = vadd.f32 0.0, %v827
    %v829 = vpop.f32.mrb[0].mxu0
    %v830 = vpop.f32.mrb[0].mxu0
    %v831 = vadd.f32 0.0, %v830
    %v832 = vpop.f32.mrb[0].mxu0
    %833 = vmatprep.mubr.bf16.mxu0 0
    %834 = vmatmul.mubr.bf16.gmra.mrb[0].mxu0 %v791
    %v835 = vpop.f32.mrb[0].mxu0
    %v836 = vadd.f32 0.0, %v835
    %v837 = vpop.f32.mrb[0].mxu0
    %v838 = vpop.f32.mrb[0].mxu0
    %v839 = vadd.f32 0.0, %v838
    %v840 = vpop.f32.mrb[0].mxu0
    %841 = vdwg.mxu0
    %v842 = vadd.f32 %v738, %v828
    %v843 = vadd.f32 %v741, %v831
    %v844 = vadd.f32 %v746, %v836
    %v845 = vadd.f32 %v749, %v839
    %v846 = vadd.f32 %v455, %v842
    %v847 = vadd.f32 %v458, %v843
    %v848 = vadd.f32 %v463, %v844
    %v849 = vadd.f32 %v466, %v845
    %v850 = vlaneseq
    %v851 = vshrl.u32 %v850, 7
    %v852 = vsub.s32 1, %v851
    %v853 = vrot.slane %v469, %v852
    %v854 = vmul.f32 %v846, %v853
    %v855 = vmul.f32 %v847, %v853
    %v856 = vmul.f32 %v848, %v853
    %v857 = vmul.f32 %v849, %v853
    %v858 = vlaneseq
    %v859 = vshrl.u32 %v858, 7
    %v860 = vsub.s32 1, %v859
    %v861 = vrot.slane %v470, %v860
    %v862 = vadd.f32 %v854, %v861
    %v863 = vadd.f32 %v855, %v861
    %v864 = vadd.f32 %v856, %v861
    %v865 = vadd.f32 %v857, %v861
    %v866 = vmax.f32 %v862, 0.0
    %v867 = vmax.f32 %v863, 0.0
    %v868 = vmax.f32 %v864, 0.0
    %v869 = vmax.f32 %v865, 0.0
    %v871 = vrot.slane %v869, 5
    %v876 = vrot.slane %v866, 7
    %v877 = vrot.slane %v867, 7
    %v878 = vsel %vm501, %v876, %v877
    %v879 = vrot.slane %v868, 7
    %v880 = vsel %vm501, %v877, %v879
    %v881 = vrot.slane %v869, 7
    %v882 = vsel %vm501, %v879, %v881
    %v887 = vsel %vm501, %v871, %v876
    %v888 = vmul.f32 %v887, %v517
    %v889 = vmul.f32 %v878, %v522
    %v890 = vmul.f32 %v880, %v527
    %v891 = vmul.f32 %v882, %v532
    %v892 = vrot.slane %v866, 1
    %v893 = vrot.slane %v867, 1
    %v894 = vsel %vm126, %v892, %v893
    %v895 = vrot.slane %v868, 1
    %v896 = vsel %vm126, %v893, %v895
    %v897 = vrot.slane %v869, 1
    %v898 = vsel %vm126, %v895, %v897
    %v903 = vrot.slane %v866, 3
    %v905 = vsel %vm551, %v897, %v903
    %v906 = vmul.f32 %v894, %v555
    %v907 = vmul.f32 %v896, %v559
    %v908 = vmul.f32 %v898, %v563
    %v909 = vmul.f32 %v905, %v567
    %v910 = vpack.c.bf16 %v889, %v888
    %v911 = vpack.c.bf16 %v891, %v890
    %s912 = scalar_lea.vmem %s5, 96
    %v913 = vld [vmem:[%s912] sm:$0xf]
    %v914 = vld [vmem:[%s912 + $0x4] sm:$0xf]
    %v915 = vld [vmem:[%s912 + $0x8] sm:$0xf]
    %v916 = vld [vmem:[%s912 + $0xc] sm:$0xf]
    %v917 = vld [vmem:[%s912 + $0x10] sm:$0xf]
    %v918 = vld [vmem:[%s912 + $0x14] sm:$0xf]
    %v919 = vld [vmem:[%s912 + $0x18] sm:$0xf]
    %v920 = vld [vmem:[%s912 + $0x1c] sm:$0xf]
    %v921 = vpack.c.bf16 %v867, %v866
    %v922 = vpack.c.bf16 %v869, %v868
    %s923 = scalar_lea.vmem %s5, 128
    %v924 = vld [vmem:[%s923] sm:$0xf]
    %v925 = vld [vmem:[%s923 + $0x4] sm:$0xf]
    %v926 = vld [vmem:[%s923 + $0x8] sm:$0xf]
    %v927 = vld [vmem:[%s923 + $0xc] sm:$0xf]
    %v928 = vld [vmem:[%s923 + $0x10] sm:$0xf]
    %v929 = vld [vmem:[%s923 + $0x14] sm:$0xf]
    %v930 = vld [vmem:[%s923 + $0x18] sm:$0xf]
    %v931 = vld [vmem:[%s923 + $0x1c] sm:$0xf]
    %v940 = vunpack.c.l.b16 %v924
    %v941 = vunpack.c.l.b16 %v925
    %v942 = vunpack.c.l.b16 %v926
    %v943 = vunpack.c.l.b16 %v927
    %v944 = vunpack.c.l.b16 %v928
    %v945 = vunpack.c.l.b16 %v929
    %v946 = vunpack.c.l.b16 %v930
    %v947 = vunpack.c.l.b16 %v931
    %v948 = vpack.c.b16 %v941, %v940
    %v949 = vpack.c.b16 %v943, %v942
    %v950 = vpack.c.b16 %v945, %v944
    %v951 = vpack.c.b16 %v947, %v946
    %v957 = vsel %vm413, %v921, 0
    %v960 = vsel %vm413, %v922, 0
    %962 = vmatprep.subr.bf16.mxu0 0
    %963 = vmatpush1.bf16.msra.mxu0 %v948
    %964 = vmatprep.subr.bf16.mxu0 0
    %965 = vmatpush1.bf16.msra.mxu0 %v949
    %966 = vmatprep.subr.bf16.mxu0 0
    %967 = vmatpush1.bf16.msra.mxu0 %v950
    %968 = vmatprep.subr.bf16.mxu0 0
    %969 = vmatpush1.bf16.msra.mxu0 %v951
    %970 = vmatprep.subr.bf16.mxu0 0
    %971 = vmatpush1.bf16.msra.mxu0 0
    %972 = vmatprep.subr.bf16.mxu0 0
    %973 = vmatpush1.bf16.msra.mxu0 0
    %974 = vmatprep.subr.bf16.mxu0 0
    %975 = vmatpush1.bf16.msra.mxu0 0
    %976 = vmatprep.subr.bf16.mxu0 0
    %977 = vmatpush1.bf16.msra.mxu0 0
    %978 = vmatprep.subr.bf16.mxu0 0
    %979 = vmatpush1.bf16.msra.mxu0 0
    %980 = vmatprep.subr.bf16.mxu0 0
    %981 = vmatpush1.bf16.msra.mxu0 0
    %982 = vmatprep.subr.bf16.mxu0 0
    %983 = vmatpush1.bf16.msra.mxu0 0
    %984 = vmatprep.subr.bf16.mxu0 0
    %985 = vmatpush1.bf16.msra.mxu0 0
    %986 = vmatprep.subr.bf16.mxu0 0
    %987 = vmatpush1.bf16.msra.mxu0 0
    %988 = vmatprep.subr.bf16.mxu0 0
    %989 = vmatpush1.bf16.msra.mxu0 0
    %990 = vmatprep.subr.bf16.mxu0 0
    %991 = vmatpush1.bf16.msra.mxu0 0
    %992 = vmatprep.subr.bf16.mxu0 0
    %993 = vmatpush1.bf16.msra.mxu0 0
    %994 = vmatprep.mubr.bf16.mxu0 0
    %995 = vmatmul.mubr.bf16.gmra.mrb[0].mxu0 %v957
    %v996 = vpop.f32.mrb[0].mxu0
    %v997 = vadd.f32 0.0, %v996
    %v998 = vpop.f32.mrb[0].mxu0
    %v999 = vpop.f32.mrb[0].mxu0
    %v1000 = vadd.f32 0.0, %v999
    %v1001 = vpop.f32.mrb[0].mxu0
    %1002 = vmatprep.mubr.bf16.mxu0 0
    %1003 = vmatmul.mubr.bf16.gmra.mrb[0].mxu0 %v960
    %v1004 = vpop.f32.mrb[0].mxu0
    %v1005 = vadd.f32 0.0, %v1004
    %v1006 = vpop.f32.mrb[0].mxu0
    %v1007 = vpop.f32.mrb[0].mxu0
    %v1008 = vadd.f32 0.0, %v1007
    %v1009 = vpop.f32.mrb[0].mxu0
    %1010 = vdwg.mxu0
    %v1019 = vunpack.c.l.b16 %v913
    %v1020 = vunpack.c.l.b16 %v914
    %v1021 = vunpack.c.l.b16 %v915
    %v1022 = vunpack.c.l.b16 %v916
    %v1023 = vunpack.c.l.b16 %v917
    %v1024 = vunpack.c.l.b16 %v918
    %v1025 = vunpack.c.l.b16 %v919
    %v1026 = vunpack.c.l.b16 %v920
    %v1027 = vpack.c.b16 %v1020, %v1019
    %v1028 = vpack.c.b16 %v1022, %v1021
    %v1029 = vpack.c.b16 %v1024, %v1023
    %v1030 = vpack.c.b16 %v1026, %v1025
    %v1036 = vsel %vm413, %v910, 0
    %v1039 = vsel %vm413, %v911, 0
    %1041 = vmatprep.subr.bf16.mxu0 0
    %1042 = vmatpush1.bf16.msra.mxu0 %v1027
    %1043 = vmatprep.subr.bf16.mxu0 0
    %1044 = vmatpush1.bf16.msra.mxu0 %v1028
    %1045 = vmatprep.subr.bf16.mxu0 0
    %1046 = vmatpush1.bf16.msra.mxu0 %v1029
    %1047 = vmatprep.subr.bf16.mxu0 0
    %1048 = vmatpush1.bf16.msra.mxu0 %v1030
    %1049 = vmatprep.subr.bf16.mxu0 0
    %1050 = vmatpush1.bf16.msra.mxu0 0
    %1051 = vmatprep.subr.bf16.mxu0 0
    %1052 = vmatpush1.bf16.msra.mxu0 0
    %1053 = vmatprep.subr.bf16.mxu0 0
    %1054 = vmatpush1.bf16.msra.mxu0 0
    %1055 = vmatprep.subr.bf16.mxu0 0
    %1056 = vmatpush1.bf16.msra.mxu0 0
    %1057 = vmatprep.subr.bf16.mxu0 0
    %1058 = vmatpush1.bf16.msra.mxu0 0
    %1059 = vmatprep.subr.bf16.mxu0 0
    %1060 = vmatpush1.bf16.msra.mxu0 0
    %1061 = vmatprep.subr.bf16.mxu0 0
    %1062 = vmatpush1.bf16.msra.mxu0 0
    %1063 = vmatprep.subr.bf16.mxu0 0
    %1064 = vmatpush1.bf16.msra.mxu0 0
    %1065 = vmatprep.subr.bf16.mxu0 0
    %1066 = vmatpush1.bf16.msra.mxu0 0
    %1067 = vmatprep.subr.bf16.mxu0 0
    %1068 = vmatpush1.bf16.msra.mxu0 0
    %1069 = vmatprep.subr.bf16.mxu0 0
    %1070 = vmatpush1.bf16.msra.mxu0 0
    %1071 = vmatprep.subr.bf16.mxu0 0
    %1072 = vmatpush1.bf16.msra.mxu0 0
    %1073 = vmatprep.mubr.bf16.mxu0 0
    %1074 = vmatmul.mubr.bf16.gmra.mrb[0].mxu0 %v1036
    %v1075 = vpop.f32.mrb[0].mxu0
    %v1076 = vadd.f32 %v997, %v1075
    %v1077 = vpop.f32.mrb[0].mxu0
    %v1078 = vpop.f32.mrb[0].mxu0
    %v1079 = vadd.f32 %v1000, %v1078
    %v1080 = vpop.f32.mrb[0].mxu0
    %1081 = vmatprep.mubr.bf16.mxu0 0
    %1082 = vmatmul.mubr.bf16.gmra.mrb[0].mxu0 %v1039
    %v1083 = vpop.f32.mrb[0].mxu0
    %v1084 = vadd.f32 %v1005, %v1083
    %v1085 = vpop.f32.mrb[0].mxu0
    %v1086 = vpop.f32.mrb[0].mxu0
    %v1087 = vadd.f32 %v1008, %v1086
    %v1088 = vpop.f32.mrb[0].mxu0
    %1089 = vdwg.mxu0
    %v1090 = vpack.c.bf16 %v907, %v906
    %v1091 = vpack.c.bf16 %v909, %v908
    %s1092 = scalar_lea.vmem %s5, 160
    %v1093 = vld [vmem:[%s1092] sm:$0xf]
    %v1094 = vld [vmem:[%s1092 + $0x4] sm:$0xf]
    %v1095 = vld [vmem:[%s1092 + $0x8] sm:$0xf]
    %v1096 = vld [vmem:[%s1092 + $0xc] sm:$0xf]
    %v1097 = vld [vmem:[%s1092 + $0x10] sm:$0xf]
    %v1098 = vld [vmem:[%s1092 + $0x14] sm:$0xf]
    %v1099 = vld [vmem:[%s1092 + $0x18] sm:$0xf]
    %v1100 = vld [vmem:[%s1092 + $0x1c] sm:$0xf]
    %v1109 = vunpack.c.l.b16 %v1093
    %v1110 = vunpack.c.l.b16 %v1094
    %v1111 = vunpack.c.l.b16 %v1095
    %v1112 = vunpack.c.l.b16 %v1096
    %v1113 = vunpack.c.l.b16 %v1097
    %v1114 = vunpack.c.l.b16 %v1098
    %v1115 = vunpack.c.l.b16 %v1099
    %v1116 = vunpack.c.l.b16 %v1100
    %v1117 = vpack.c.b16 %v1110, %v1109
    %v1118 = vpack.c.b16 %v1112, %v1111
    %v1119 = vpack.c.b16 %v1114, %v1113
    %v1120 = vpack.c.b16 %v1116, %v1115
    %v1126 = vsel %vm413, %v1090, 0
    %v1129 = vsel %vm413, %v1091, 0
    %1131 = vmatprep.subr.bf16.mxu0 0
    %1132 = vmatpush1.bf16.msra.mxu0 %v1117
    %1133 = vmatprep.subr.bf16.mxu0 0
    %1134 = vmatpush1.bf16.msra.mxu0 %v1118
    %1135 = vmatprep.subr.bf16.mxu0 0
    %1136 = vmatpush1.bf16.msra.mxu0 %v1119
    %1137 = vmatprep.subr.bf16.mxu0 0
    %1138 = vmatpush1.bf16.msra.mxu0 %v1120
    %1139 = vmatprep.subr.bf16.mxu0 0
    %1140 = vmatpush1.bf16.msra.mxu0 0
    %1141 = vmatprep.subr.bf16.mxu0 0
    %1142 = vmatpush1.bf16.msra.mxu0 0
    %1143 = vmatprep.subr.bf16.mxu0 0
    %1144 = vmatpush1.bf16.msra.mxu0 0
    %1145 = vmatprep.subr.bf16.mxu0 0
    %1146 = vmatpush1.bf16.msra.mxu0 0
    %1147 = vmatprep.subr.bf16.mxu0 0
    %1148 = vmatpush1.bf16.msra.mxu0 0
    %1149 = vmatprep.subr.bf16.mxu0 0
    %1150 = vmatpush1.bf16.msra.mxu0 0
    %1151 = vmatprep.subr.bf16.mxu0 0
    %1152 = vmatpush1.bf16.msra.mxu0 0
    %1153 = vmatprep.subr.bf16.mxu0 0
    %1154 = vmatpush1.bf16.msra.mxu0 0
    %1155 = vmatprep.subr.bf16.mxu0 0
    %1156 = vmatpush1.bf16.msra.mxu0 0
    %1157 = vmatprep.subr.bf16.mxu0 0
    %1158 = vmatpush1.bf16.msra.mxu0 0
    %1159 = vmatprep.subr.bf16.mxu0 0
    %1160 = vmatpush1.bf16.msra.mxu0 0
    %1161 = vmatprep.subr.bf16.mxu0 0
    %1162 = vmatpush1.bf16.msra.mxu0 0
    %1163 = vmatprep.mubr.bf16.mxu0 0
    %1164 = vmatmul.mubr.bf16.gmra.mrb[0].mxu0 %v1126
    %v1165 = vpop.f32.mrb[0].mxu0
    %v1166 = vadd.f32 0.0, %v1165
    %v1167 = vpop.f32.mrb[0].mxu0
    %v1168 = vpop.f32.mrb[0].mxu0
    %v1169 = vadd.f32 0.0, %v1168
    %v1170 = vpop.f32.mrb[0].mxu0
    %1171 = vmatprep.mubr.bf16.mxu0 0
    %1172 = vmatmul.mubr.bf16.gmra.mrb[0].mxu0 %v1129
    %v1173 = vpop.f32.mrb[0].mxu0
    %v1174 = vadd.f32 0.0, %v1173
    %v1175 = vpop.f32.mrb[0].mxu0
    %v1176 = vpop.f32.mrb[0].mxu0
    %v1177 = vadd.f32 0.0, %v1176
    %v1178 = vpop.f32.mrb[0].mxu0
    %1179 = vdwg.mxu0
    %v1180 = vadd.f32 %v1076, %v1166
    %v1181 = vadd.f32 %v1079, %v1169
    %v1182 = vadd.f32 %v1084, %v1174
    %v1183 = vadd.f32 %v1087, %v1177
    %v1184 = vadd.f32 %v846, %v1180
    %v1185 = vadd.f32 %v847, %v1181
    %v1186 = vadd.f32 %v848, %v1182
    %v1187 = vadd.f32 %v849, %v1183
    %v1188 = vlaneseq
    %v1189 = vshrl.u32 %v1188, 7
    %v1190 = vsub.s32 2, %v1189
    %v1191 = vrot.slane %v469, %v1190
    %v1192 = vmul.f32 %v1184, %v1191
    %v1193 = vmul.f32 %v1185, %v1191
    %v1194 = vmul.f32 %v1186, %v1191
    %v1195 = vmul.f32 %v1187, %v1191
    %v1196 = vlaneseq
    %v1197 = vshrl.u32 %v1196, 7
    %v1198 = vsub.s32 2, %v1197
    %v1199 = vrot.slane %v470, %v1198
    %v1200 = vadd.f32 %v1192, %v1199
    %v1201 = vadd.f32 %v1193, %v1199
    %v1202 = vadd.f32 %v1194, %v1199
    %v1203 = vadd.f32 %v1195, %v1199
    %v1204 = vmax.f32 %v1200, 0.0
    %v1205 = vmax.f32 %v1201, 0.0
    %v1206 = vmax.f32 %v1202, 0.0
    %v1207 = vmax.f32 %v1203, 0.0
    %v1208 = vld [vmem:[%s9] sm:$0xf]
    %v1209 = vld [vmem:[%s9 + $0x4] sm:$0x7]
    %v1210 = vpack.c.bf16 %v1205, %v1204
    %v1211 = vpack.c.bf16 %v1207, %v1206
    %v1214 = vunpack.c.l.b16 %v1208
    %v1215 = vunpack.c.l.b16 %v1209
    %v1216 = vpack.c.b16 %v1215, %v1214
    %vm1217 = vcmask 244736
    %v1219 = vsel %vm1217, %v1216, 0
    %v1222 = vsel %vm126, %v1211, 0
    %1224 = vmatprep.subr.bf16.mxu0 0
    %1225 = vmatpush1.bf16.msra.mxu0 %v1210
    %1226 = vmatprep.subr.bf16.mxu0 0
    %1227 = vmatpush1.bf16.msra.mxu0 %v1222
    %1228 = vmatprep.subr.bf16.mxu0 0
    %1229 = vmatpush1.bf16.msra.mxu0 0
    %1230 = vmatprep.subr.bf16.mxu0 0
    %1231 = vmatpush1.bf16.msra.mxu0 0
    %1232 = vmatprep.subr.bf16.mxu0 0
    %1233 = vmatpush1.bf16.msra.mxu0 0
    %1234 = vmatprep.subr.bf16.mxu0 0
    %1235 = vmatpush1.bf16.msra.mxu0 0
    %1236 = vmatprep.subr.bf16.mxu0 0
    %1237 = vmatpush1.bf16.msra.mxu0 0
    %1238 = vmatprep.subr.bf16.mxu0 0
    %1239 = vmatpush1.bf16.msra.mxu0 0
    %1240 = vmatprep.subr.bf16.mxu0 0
    %1241 = vmatpush1.bf16.msra.mxu0 0
    %1242 = vmatprep.subr.bf16.mxu0 0
    %1243 = vmatpush1.bf16.msra.mxu0 0
    %1244 = vmatprep.subr.bf16.mxu0 0
    %1245 = vmatpush1.bf16.msra.mxu0 0
    %1246 = vmatprep.subr.bf16.mxu0 0
    %1247 = vmatpush1.bf16.msra.mxu0 0
    %1248 = vmatprep.subr.bf16.mxu0 0
    %1249 = vmatpush1.bf16.msra.mxu0 0
    %1250 = vmatprep.subr.bf16.mxu0 0
    %1251 = vmatpush1.bf16.msra.mxu0 0
    %1252 = vmatprep.subr.bf16.mxu0 0
    %1253 = vmatpush1.bf16.msra.mxu0 0
    %1254 = vmatprep.subr.bf16.mxu0 0
    %1255 = vmatpush1.bf16.msra.mxu0 0
    %1256 = vmatprep.mubr.bf16.mxu0 0
    %1257 = vmatmul.mubr.bf16.gmra.mrb[0].mxu0 %v1219
    %v1258 = vpop.f32.mrb[0].mxu0
    %v1259 = vadd.f32 0.0, %v1258
    %v1260 = vpop.f32.mrb[0].mxu0
    %v1261 = vpop.f32.mrb[0].mxu0
    %v1262 = vadd.f32 0.0, %v1261
    %v1263 = vpop.f32.mrb[0].mxu0
    %1264 = vdwg.mxu0
    %v1265 = vpack.c.bf16 %v1262, %v1259
    %v1266 = vld [vmem:[#allocation6] sm:$0xf]
    %v1267 = vld [vmem:[#allocation6 + $0x4] sm:$0xf]
    %v1268 = vld [vmem:[#allocation6 + $0x8] sm:$0xf]
    %v1269 = vld [vmem:[#allocation6 + $0xc] sm:$0xf]
    %v1270 = vld [vmem:[#allocation6 + $0x10] sm:$0xf]
    %v1271 = vld [vmem:[#allocation6 + $0x14] sm:$0xf]
    %v1272 = vld [vmem:[#allocation6 + $0x18] sm:$0xf]
    %v1273 = vld [vmem:[#allocation6 + $0x1c] sm:$0xf]
    %v1282 = vunpack.c.l.b16 %v1266
    %v1283 = vunpack.c.l.b16 %v1267
    %v1284 = vunpack.c.l.b16 %v1268
    %v1285 = vunpack.c.l.b16 %v1269
    %v1286 = vunpack.c.l.b16 %v1270
    %v1287 = vunpack.c.l.b16 %v1271
    %v1288 = vunpack.c.l.b16 %v1272
    %v1289 = vunpack.c.l.b16 %v1273
    %v1290 = vpack.c.b16 %v1283, %v1282
    %v1291 = vpack.c.b16 %v1285, %v1284
    %v1292 = vpack.c.b16 %v1287, %v1286
    %v1293 = vpack.c.b16 %v1289, %v1288
    %v1299 = vsel %vm413, %v1265, 0
    %1301 = vmatprep.subr.bf16.mxu0 0
    %1302 = vmatpush1.bf16.msra.mxu0 %v1290
    %1303 = vmatprep.subr.bf16.mxu0 0
    %1304 = vmatpush1.bf16.msra.mxu0 %v1291
    %1305 = vmatprep.subr.bf16.mxu0 0
    %1306 = vmatpush1.bf16.msra.mxu0 %v1292
    %1307 = vmatprep.subr.bf16.mxu0 0
    %1308 = vmatpush1.bf16.msra.mxu0 %v1293
    %1309 = vmatprep.subr.bf16.mxu0 0
    %1310 = vmatpush1.bf16.msra.mxu0 0
    %1311 = vmatprep.subr.bf16.mxu0 0
    %1312 = vmatpush1.bf16.msra.mxu0 0
    %1313 = vmatprep.subr.bf16.mxu0 0
    %1314 = vmatpush1.bf16.msra.mxu0 0
    %1315 = vmatprep.subr.bf16.mxu0 0
    %1316 = vmatpush1.bf16.msra.mxu0 0
    %1317 = vmatprep.subr.bf16.mxu0 0
    %1318 = vmatpush1.bf16.msra.mxu0 0
    %1319 = vmatprep.subr.bf16.mxu0 0
    %1320 = vmatpush1.bf16.msra.mxu0 0
    %1321 = vmatprep.subr.bf16.mxu0 0
    %1322 = vmatpush1.bf16.msra.mxu0 0
    %1323 = vmatprep.subr.bf16.mxu0 0
    %1324 = vmatpush1.bf16.msra.mxu0 0
    %1325 = vmatprep.subr.bf16.mxu0 0
    %1326 = vmatpush1.bf16.msra.mxu0 0
    %1327 = vmatprep.subr.bf16.mxu0 0
    %1328 = vmatpush1.bf16.msra.mxu0 0
    %1329 = vmatprep.subr.bf16.mxu0 0
    %1330 = vmatpush1.bf16.msra.mxu0 0
    %1331 = vmatprep.subr.bf16.mxu0 0
    %1332 = vmatpush1.bf16.msra.mxu0 0
    %1333 = vmatprep.mubr.bf16.mxu0 0
    %1334 = vmatmul.mubr.bf16.gmra.mrb[0].mxu0 %v1299
    %v1335 = vpop.f32.mrb[0].mxu0
    %v1336 = vadd.f32 0.0, %v1335
    %v1337 = vpop.f32.mrb[0].mxu0
    %v1338 = vpop.f32.mrb[0].mxu0
    %v1339 = vadd.f32 0.0, %v1338
    %v1340 = vpop.f32.mrb[0].mxu0
    %1341 = vdwg.mxu0
    %v1342 = vld [vmem:[%s8] sm:$0xff]
    %v1343 = vld [vmem:[%s8 + $0x8] sm:$0x3f]
    %v1344 = vlaneseq
    %v1345 = vshrl.u32 %v1344, 7
    %v1346 = vsub.s32 3, %v1345
    %v1347 = vrot.slane %v469, %v1346
    %v1348 = vmul.f32 %v1336, %v1347
    %v1349 = vmul.f32 %v1339, %v1347
    %v1350 = vlaneseq
    %v1351 = vshrl.u32 %v1350, 7
    %v1352 = vsub.s32 3, %v1351
    %v1353 = vrot.slane %v470, %v1352
    %v1354 = vadd.f32 %v1348, %v1353
    %v1355 = vadd.f32 %v1349, %v1353
    %v1356 = vmax.f32 %v1354, 0.0
    %v1357 = vmax.f32 %v1355, 0.0
    %v1359 = vrot.slane %v1357, 5
    %v1362 = vrot.slane %v1356, 7
    %v1363 = vrot.slane %v1357, 7
    %v1364 = vsel %vm501, %v1362, %v1363
    %v1367 = vsel %vm501, %v1359, %v1362
    %1369 = vset.pattern.permute.xlu0 0
    %1370 = vperm.xlu0 %1369, %v1342
    %v1371 = vpop.permute.xlu0 %1370
    %1374 = vset.pattern.permute.xlu0 0
    %1375 = vperm.xlu0 %1374, %v1343
    %v1376 = vpop.permute.xlu0 %1375
    %v1378 = vmul.f32 %v1367, %v1371
    %v1379 = vmul.f32 %v1364, %v1376
    %v1380 = vrot.slane %v1356, 1
    %v1381 = vrot.slane %v1357, 1
    %v1382 = vsel %vm126, %v1380, %v1381
    %v1385 = vrot.slane %v1356, 3
    %v1387 = vsel %vm551, %v1381, %v1385
    %1388 = vset.pattern.permute.xlu0 1
    %1389 = vperm.xlu0 %1388, %v1342
    %v1390 = vpop.permute.xlu0 %1389
    %1392 = vset.pattern.permute.xlu0 1
    %1393 = vperm.xlu0 %1392, %v1343
    %v1394 = vpop.permute.xlu0 %1393
    %v1396 = vmul.f32 %v1382, %v1390
    %v1397 = vmul.f32 %v1387, %v1394
    %v1398 = vpack.c.bf16 %v1379, %v1378
    %s1399 = scalar_lea.vmem %s5, 192
    %v1400 = vld [vmem:[%s1399] sm:$0xf]
    %v1401 = vld [vmem:[%s1399 + $0x4] sm:$0xf]
    %v1402 = vld [vmem:[%s1399 + $0x8] sm:$0xf]
    %v1403 = vld [vmem:[%s1399 + $0xc] sm:$0xf]
    %v1404 = vld [vmem:[%s1399 + $0x10] sm:$0xf]
    %v1405 = vld [vmem:[%s1399 + $0x14] sm:$0xf]
    %v1406 = vld [vmem:[%s1399 + $0x18] sm:$0xf]
    %v1407 = vld [vmem:[%s1399 + $0x1c] sm:$0xf]
    %v1408 = vpack.c.bf16 %v1357, %v1356
    %s1409 = scalar_lea.vmem %s5, 224
    %v1410 = vld [vmem:[%s1409] sm:$0xf]
    %v1411 = vld [vmem:[%s1409 + $0x4] sm:$0xf]
    %v1412 = vld [vmem:[%s1409 + $0x8] sm:$0xf]
    %v1413 = vld [vmem:[%s1409 + $0xc] sm:$0xf]
    %v1414 = vld [vmem:[%s1409 + $0x10] sm:$0xf]
    %v1415 = vld [vmem:[%s1409 + $0x14] sm:$0xf]
    %v1416 = vld [vmem:[%s1409 + $0x18] sm:$0xf]
    %v1417 = vld [vmem:[%s1409 + $0x1c] sm:$0xf]
    %v1426 = vunpack.c.l.b16 %v1410
    %v1427 = vunpack.c.l.b16 %v1411
    %v1428 = vunpack.c.l.b16 %v1412
    %v1429 = vunpack.c.l.b16 %v1413
    %v1430 = vunpack.c.l.b16 %v1414
    %v1431 = vunpack.c.l.b16 %v1415
    %v1432 = vunpack.c.l.b16 %v1416
    %v1433 = vunpack.c.l.b16 %v1417
    %v1434 = vpack.c.b16 %v1427, %v1426
    %v1435 = vpack.c.b16 %v1429, %v1428
    %v1436 = vpack.c.b16 %v1431, %v1430
    %v1437 = vpack.c.b16 %v1433, %v1432
    %v1443 = vsel %vm413, %v1408, 0
    %1445 = vmatprep.subr.bf16.mxu0 0
    %1446 = vmatpush1.bf16.msra.mxu0 %v1434
    %1447 = vmatprep.subr.bf16.mxu0 0
    %1448 = vmatpush1.bf16.msra.mxu0 %v1435
    %1449 = vmatprep.subr.bf16.mxu0 0
    %1450 = vmatpush1.bf16.msra.mxu0 %v1436
    %1451 = vmatprep.subr.bf16.mxu0 0
    %1452 = vmatpush1.bf16.msra.mxu0 %v1437
    %1453 = vmatprep.subr.bf16.mxu0 0
    %1454 = vmatpush1.bf16.msra.mxu0 0
    %1455 = vmatprep.subr.bf16.mxu0 0
    %1456 = vmatpush1.bf16.msra.mxu0 0
    %1457 = vmatprep.subr.bf16.mxu0 0
    %1458 = vmatpush1.bf16.msra.mxu0 0
    %1459 = vmatprep.subr.bf16.mxu0 0
    %1460 = vmatpush1.bf16.msra.mxu0 0
    %1461 = vmatprep.subr.bf16.mxu0 0
    %1462 = vmatpush1.bf16.msra.mxu0 0
    %1463 = vmatprep.subr.bf16.mxu0 0
    %1464 = vmatpush1.bf16.msra.mxu0 0
    %1465 = vmatprep.subr.bf16.mxu0 0
    %1466 = vmatpush1.bf16.msra.mxu0 0
    %1467 = vmatprep.subr.bf16.mxu0 0
    %1468 = vmatpush1.bf16.msra.mxu0 0
    %1469 = vmatprep.subr.bf16.mxu0 0
    %1470 = vmatpush1.bf16.msra.mxu0 0
    %1471 = vmatprep.subr.bf16.mxu0 0
    %1472 = vmatpush1.bf16.msra.mxu0 0
    %1473 = vmatprep.subr.bf16.mxu0 0
    %1474 = vmatpush1.bf16.msra.mxu0 0
    %1475 = vmatprep.subr.bf16.mxu0 0
    %1476 = vmatpush1.bf16.msra.mxu0 0
    %1477 = vmatprep.mubr.bf16.mxu0 0
    %1478 = vmatmul.mubr.bf16.gmra.mrb[0].mxu0 %v1443
    %v1479 = vpop.f32.mrb[0].mxu0
    %v1480 = vadd.f32 0.0, %v1479
    %v1481 = vpop.f32.mrb[0].mxu0
    %v1482 = vpop.f32.mrb[0].mxu0
    %v1483 = vadd.f32 0.0, %v1482
    %v1484 = vpop.f32.mrb[0].mxu0
    %1485 = vdwg.mxu0
    %v1494 = vunpack.c.l.b16 %v1400
    %v1495 = vunpack.c.l.b16 %v1401
    %v1496 = vunpack.c.l.b16 %v1402
    %v1497 = vunpack.c.l.b16 %v1403
    %v1498 = vunpack.c.l.b16 %v1404
    %v1499 = vunpack.c.l.b16 %v1405
    %v1500 = vunpack.c.l.b16 %v1406
    %v1501 = vunpack.c.l.b16 %v1407
    %v1502 = vpack.c.b16 %v1495, %v1494
    %v1503 = vpack.c.b16 %v1497, %v1496
    %v1504 = vpack.c.b16 %v1499, %v1498
    %v1505 = vpack.c.b16 %v1501, %v1500
    %v1511 = vsel %vm413, %v1398, 0
    %1513 = vmatprep.subr.bf16.mxu0 0
    %1514 = vmatpush1.bf16.msra.mxu0 %v1502
    %1515 = vmatprep.subr.bf16.mxu0 0
    %1516 = vmatpush1.bf16.msra.mxu0 %v1503
    %1517 = vmatprep.subr.bf16.mxu0 0
    %1518 = vmatpush1.bf16.msra.mxu0 %v1504
    %1519 = vmatprep.subr.bf16.mxu0 0
    %1520 = vmatpush1.bf16.msra.mxu0 %v1505
    %1521 = vmatprep.subr.bf16.mxu0 0
    %1522 = vmatpush1.bf16.msra.mxu0 0
    %1523 = vmatprep.subr.bf16.mxu0 0
    %1524 = vmatpush1.bf16.msra.mxu0 0
    %1525 = vmatprep.subr.bf16.mxu0 0
    %1526 = vmatpush1.bf16.msra.mxu0 0
    %1527 = vmatprep.subr.bf16.mxu0 0
    %1528 = vmatpush1.bf16.msra.mxu0 0
    %1529 = vmatprep.subr.bf16.mxu0 0
    %1530 = vmatpush1.bf16.msra.mxu0 0
    %1531 = vmatprep.subr.bf16.mxu0 0
    %1532 = vmatpush1.bf16.msra.mxu0 0
    %1533 = vmatprep.subr.bf16.mxu0 0
    %1534 = vmatpush1.bf16.msra.mxu0 0
    %1535 = vmatprep.subr.bf16.mxu0 0
    %1536 = vmatpush1.bf16.msra.mxu0 0
    %1537 = vmatprep.subr.bf16.mxu0 0
    %1538 = vmatpush1.bf16.msra.mxu0 0
    %1539 = vmatprep.subr.bf16.mxu0 0
    %1540 = vmatpush1.bf16.msra.mxu0 0
    %1541 = vmatprep.subr.bf16.mxu0 0
    %1542 = vmatpush1.bf16.msra.mxu0 0
    %1543 = vmatprep.subr.bf16.mxu0 0
    %1544 = vmatpush1.bf16.msra.mxu0 0
    %1545 = vmatprep.mubr.bf16.mxu0 0
    %1546 = vmatmul.mubr.bf16.gmra.mrb[0].mxu0 %v1511
    %v1547 = vpop.f32.mrb[0].mxu0
    %v1548 = vadd.f32 %v1480, %v1547
    %v1549 = vpop.f32.mrb[0].mxu0
    %v1550 = vpop.f32.mrb[0].mxu0
    %v1551 = vadd.f32 %v1483, %v1550
    %v1552 = vpop.f32.mrb[0].mxu0
    %1553 = vdwg.mxu0
    %v1554 = vpack.c.bf16 %v1397, %v1396
    %s1555 = scalar_lea.vmem %s5, 256
    %v1556 = vld [vmem:[%s1555] sm:$0xf]
    %v1557 = vld [vmem:[%s1555 + $0x4] sm:$0xf]
    %v1558 = vld [vmem:[%s1555 + $0x8] sm:$0xf]
    %v1559 = vld [vmem:[%s1555 + $0xc] sm:$0xf]
    %v1560 = vld [vmem:[%s1555 + $0x10] sm:$0xf]
    %v1561 = vld [vmem:[%s1555 + $0x14] sm:$0xf]
    %v1562 = vld [vmem:[%s1555 + $0x18] sm:$0xf]
    %v1563 = vld [vmem:[%s1555 + $0x1c] sm:$0xf]
    %v1572 = vunpack.c.l.b16 %v1556
    %v1573 = vunpack.c.l.b16 %v1557
    %v1574 = vunpack.c.l.b16 %v1558
    %v1575 = vunpack.c.l.b16 %v1559
    %v1576 = vunpack.c.l.b16 %v1560
    %v1577 = vunpack.c.l.b16 %v1561
    %v1578 = vunpack.c.l.b16 %v1562
    %v1579 = vunpack.c.l.b16 %v1563
    %v1580 = vpack.c.b16 %v1573, %v1572
    %v1581 = vpack.c.b16 %v1575, %v1574
    %v1582 = vpack.c.b16 %v1577, %v1576
    %v1583 = vpack.c.b16 %v1579, %v1578
    %v1589 = vsel %vm413, %v1554, 0
    %1591 = vmatprep.subr.bf16.mxu0 0
    %1592 = vmatpush1.bf16.msra.mxu0 %v1580
    %1593 = vmatprep.subr.bf16.mxu0 0
    %1594 = vmatpush1.bf16.msra.mxu0 %v1581
    %1595 = vmatprep.subr.bf16.mxu0 0
    %1596 = vmatpush1.bf16.msra.mxu0 %v1582
    %1597 = vmatprep.subr.bf16.mxu0 0
    %1598 = vmatpush1.bf16.msra.mxu0 %v1583
    %1599 = vmatprep.subr.bf16.mxu0 0
    %1600 = vmatpush1.bf16.msra.mxu0 0
    %1601 = vmatprep.subr.bf16.mxu0 0
    %1602 = vmatpush1.bf16.msra.mxu0 0
    %1603 = vmatprep.subr.bf16.mxu0 0
    %1604 = vmatpush1.bf16.msra.mxu0 0
    %1605 = vmatprep.subr.bf16.mxu0 0
    %1606 = vmatpush1.bf16.msra.mxu0 0
    %1607 = vmatprep.subr.bf16.mxu0 0
    %1608 = vmatpush1.bf16.msra.mxu0 0
    %1609 = vmatprep.subr.bf16.mxu0 0
    %1610 = vmatpush1.bf16.msra.mxu0 0
    %1611 = vmatprep.subr.bf16.mxu0 0
    %1612 = vmatpush1.bf16.msra.mxu0 0
    %1613 = vmatprep.subr.bf16.mxu0 0
    %1614 = vmatpush1.bf16.msra.mxu0 0
    %1615 = vmatprep.subr.bf16.mxu0 0
    %1616 = vmatpush1.bf16.msra.mxu0 0
    %1617 = vmatprep.subr.bf16.mxu0 0
    %1618 = vmatpush1.bf16.msra.mxu0 0
    %1619 = vmatprep.subr.bf16.mxu0 0
    %1620 = vmatpush1.bf16.msra.mxu0 0
    %1621 = vmatprep.subr.bf16.mxu0 0
    %1622 = vmatpush1.bf16.msra.mxu0 0
    %1623 = vmatprep.mubr.bf16.mxu0 0
    %1624 = vmatmul.mubr.bf16.gmra.mrb[0].mxu0 %v1589
    %v1625 = vpop.f32.mrb[0].mxu0
    %v1626 = vadd.f32 0.0, %v1625
    %v1627 = vpop.f32.mrb[0].mxu0
    %v1628 = vpop.f32.mrb[0].mxu0
    %v1629 = vadd.f32 0.0, %v1628
    %v1630 = vpop.f32.mrb[0].mxu0
    %1631 = vdwg.mxu0
    %v1632 = vadd.f32 %v1548, %v1626
    %v1633 = vadd.f32 %v1551, %v1629
    %v1634 = vadd.f32 %v1336, %v1632
    %v1635 = vadd.f32 %v1339, %v1633
    %v1636 = vlaneseq
    %v1637 = vshrl.u32 %v1636, 7
    %v1638 = vsub.s32 4, %v1637
    %v1639 = vrot.slane %v469, %v1638
    %v1640 = vmul.f32 %v1634, %v1639
    %v1641 = vmul.f32 %v1635, %v1639
    %v1642 = vlaneseq
    %v1643 = vshrl.u32 %v1642, 7
    %v1644 = vsub.s32 4, %v1643
    %v1645 = vrot.slane %v470, %v1644
    %v1646 = vadd.f32 %v1640, %v1645
    %v1647 = vadd.f32 %v1641, %v1645
    %v1648 = vmax.f32 %v1646, 0.0
    %v1649 = vmax.f32 %v1647, 0.0
    %v1651 = vrot.slane %v1649, 5
    %v1654 = vrot.slane %v1648, 7
    %v1655 = vrot.slane %v1649, 7
    %v1656 = vsel %vm501, %v1654, %v1655
    %v1659 = vsel %vm501, %v1651, %v1654
    %v1660 = vmul.f32 %v1659, %v1371
    %v1661 = vmul.f32 %v1656, %v1376
    %v1662 = vrot.slane %v1648, 1
    %v1663 = vrot.slane %v1649, 1
    %v1664 = vsel %vm126, %v1662, %v1663
    %v1667 = vrot.slane %v1648, 3
    %v1669 = vsel %vm551, %v1663, %v1667
    %v1670 = vmul.f32 %v1664, %v1390
    %v1671 = vmul.f32 %v1669, %v1394
    %v1672 = vpack.c.bf16 %v1661, %v1660
    %s1673 = scalar_lea.vmem %s5, 288
    %v1674 = vld [vmem:[%s1673] sm:$0xf]
    %v1675 = vld [vmem:[%s1673 + $0x4] sm:$0xf]
    %v1676 = vld [vmem:[%s1673 + $0x8] sm:$0xf]
    %v1677 = vld [vmem:[%s1673 + $0xc] sm:$0xf]
    %v1678 = vld [vmem:[%s1673 + $0x10] sm:$0xf]
    %v1679 = vld [vmem:[%s1673 + $0x14] sm:$0xf]
    %v1680 = vld [vmem:[%s1673 + $0x18] sm:$0xf]
    %v1681 = vld [vmem:[%s1673 + $0x1c] sm:$0xf]
    %v1682 = vpack.c.bf16 %v1649, %v1648
    %s1683 = scalar_lea.vmem %s5, 320
    %v1684 = vld [vmem:[%s1683] sm:$0xf]
    %v1685 = vld [vmem:[%s1683 + $0x4] sm:$0xf]
    %v1686 = vld [vmem:[%s1683 + $0x8] sm:$0xf]
    %v1687 = vld [vmem:[%s1683 + $0xc] sm:$0xf]
    %v1688 = vld [vmem:[%s1683 + $0x10] sm:$0xf]
    %v1689 = vld [vmem:[%s1683 + $0x14] sm:$0xf]
    %v1690 = vld [vmem:[%s1683 + $0x18] sm:$0xf]
    %v1691 = vld [vmem:[%s1683 + $0x1c] sm:$0xf]
    %v1700 = vunpack.c.l.b16 %v1684
    %v1701 = vunpack.c.l.b16 %v1685
    %v1702 = vunpack.c.l.b16 %v1686
    %v1703 = vunpack.c.l.b16 %v1687
    %v1704 = vunpack.c.l.b16 %v1688
    %v1705 = vunpack.c.l.b16 %v1689
    %v1706 = vunpack.c.l.b16 %v1690
    %v1707 = vunpack.c.l.b16 %v1691
    %v1708 = vpack.c.b16 %v1701, %v1700
    %v1709 = vpack.c.b16 %v1703, %v1702
    %v1710 = vpack.c.b16 %v1705, %v1704
    %v1711 = vpack.c.b16 %v1707, %v1706
    %v1717 = vsel %vm413, %v1682, 0
    %1719 = vmatprep.subr.bf16.mxu0 0
    %1720 = vmatpush1.bf16.msra.mxu0 %v1708
    %1721 = vmatprep.subr.bf16.mxu0 0
    %1722 = vmatpush1.bf16.msra.mxu0 %v1709
    %1723 = vmatprep.subr.bf16.mxu0 0
    %1724 = vmatpush1.bf16.msra.mxu0 %v1710
    %1725 = vmatprep.subr.bf16.mxu0 0
    %1726 = vmatpush1.bf16.msra.mxu0 %v1711
    %1727 = vmatprep.subr.bf16.mxu0 0
    %1728 = vmatpush1.bf16.msra.mxu0 0
    %1729 = vmatprep.subr.bf16.mxu0 0
    %1730 = vmatpush1.bf16.msra.mxu0 0
    %1731 = vmatprep.subr.bf16.mxu0 0
    %1732 = vmatpush1.bf16.msra.mxu0 0
    %1733 = vmatprep.subr.bf16.mxu0 0
    %1734 = vmatpush1.bf16.msra.mxu0 0
    %1735 = vmatprep.subr.bf16.mxu0 0
    %1736 = vmatpush1.bf16.msra.mxu0 0
    %1737 = vmatprep.subr.bf16.mxu0 0
    %1738 = vmatpush1.bf16.msra.mxu0 0
    %1739 = vmatprep.subr.bf16.mxu0 0
    %1740 = vmatpush1.bf16.msra.mxu0 0
    %1741 = vmatprep.subr.bf16.mxu0 0
    %1742 = vmatpush1.bf16.msra.mxu0 0
    %1743 = vmatprep.subr.bf16.mxu0 0
    %1744 = vmatpush1.bf16.msra.mxu0 0
    %1745 = vmatprep.subr.bf16.mxu0 0
    %1746 = vmatpush1.bf16.msra.mxu0 0
    %1747 = vmatprep.subr.bf16.mxu0 0
    %1748 = vmatpush1.bf16.msra.mxu0 0
    %1749 = vmatprep.subr.bf16.mxu0 0
    %1750 = vmatpush1.bf16.msra.mxu0 0
    %1751 = vmatprep.mubr.bf16.mxu0 0
    %1752 = vmatmul.mubr.bf16.gmra.mrb[0].mxu0 %v1717
    %v1753 = vpop.f32.mrb[0].mxu0
    %v1754 = vadd.f32 0.0, %v1753
    %v1755 = vpop.f32.mrb[0].mxu0
    %v1756 = vpop.f32.mrb[0].mxu0
    %v1757 = vadd.f32 0.0, %v1756
    %v1758 = vpop.f32.mrb[0].mxu0
    %1759 = vdwg.mxu0
    %v1768 = vunpack.c.l.b16 %v1674
    %v1769 = vunpack.c.l.b16 %v1675
    %v1770 = vunpack.c.l.b16 %v1676
    %v1771 = vunpack.c.l.b16 %v1677
    %v1772 = vunpack.c.l.b16 %v1678
    %v1773 = vunpack.c.l.b16 %v1679
    %v1774 = vunpack.c.l.b16 %v1680
    %v1775 = vunpack.c.l.b16 %v1681
    %v1776 = vpack.c.b16 %v1769, %v1768
    %v1777 = vpack.c.b16 %v1771, %v1770
    %v1778 = vpack.c.b16 %v1773, %v1772
    %v1779 = vpack.c.b16 %v1775, %v1774
    %v1785 = vsel %vm413, %v1672, 0
    %1787 = vmatprep.subr.bf16.mxu0 0
    %1788 = vmatpush1.bf16.msra.mxu0 %v1776
    %1789 = vmatprep.subr.bf16.mxu0 0
    %1790 = vmatpush1.bf16.msra.mxu0 %v1777
    %1791 = vmatprep.subr.bf16.mxu0 0
    %1792 = vmatpush1.bf16.msra.mxu0 %v1778
    %1793 = vmatprep.subr.bf16.mxu0 0
    %1794 = vmatpush1.bf16.msra.mxu0 %v1779
    %1795 = vmatprep.subr.bf16.mxu0 0
    %1796 = vmatpush1.bf16.msra.mxu0 0
    %1797 = vmatprep.subr.bf16.mxu0 0
    %1798 = vmatpush1.bf16.msra.mxu0 0
    %1799 = vmatprep.subr.bf16.mxu0 0
    %1800 = vmatpush1.bf16.msra.mxu0 0
    %1801 = vmatprep.subr.bf16.mxu0 0
    %1802 = vmatpush1.bf16.msra.mxu0 0
    %1803 = vmatprep.subr.bf16.mxu0 0
    %1804 = vmatpush1.bf16.msra.mxu0 0
    %1805 = vmatprep.subr.bf16.mxu0 0
    %1806 = vmatpush1.bf16.msra.mxu0 0
    %1807 = vmatprep.subr.bf16.mxu0 0
    %1808 = vmatpush1.bf16.msra.mxu0 0
    %1809 = vmatprep.subr.bf16.mxu0 0
    %1810 = vmatpush1.bf16.msra.mxu0 0
    %1811 = vmatprep.subr.bf16.mxu0 0
    %1812 = vmatpush1.bf16.msra.mxu0 0
    %1813 = vmatprep.subr.bf16.mxu0 0
    %1814 = vmatpush1.bf16.msra.mxu0 0
    %1815 = vmatprep.subr.bf16.mxu0 0
    %1816 = vmatpush1.bf16.msra.mxu0 0
    %1817 = vmatprep.subr.bf16.mxu0 0
    %1818 = vmatpush1.bf16.msra.mxu0 0
    %1819 = vmatprep.mubr.bf16.mxu0 0
    %1820 = vmatmul.mubr.bf16.gmra.mrb[0].mxu0 %v1785
    %v1821 = vpop.f32.mrb[0].mxu0
    %v1822 = vadd.f32 %v1754, %v1821
    %v1823 = vpop.f32.mrb[0].mxu0
    %v1824 = vpop.f32.mrb[0].mxu0
    %v1825 = vadd.f32 %v1757, %v1824
    %v1826 = vpop.f32.mrb[0].mxu0
    %1827 = vdwg.mxu0
    %v1828 = vpack.c.bf16 %v1671, %v1670
    %s1829 = scalar_lea.vmem %s5, 352
    %v1830 = vld [vmem:[%s1829] sm:$0xf]
    %v1831 = vld [vmem:[%s1829 + $0x4] sm:$0xf]
    %v1832 = vld [vmem:[%s1829 + $0x8] sm:$0xf]
    %v1833 = vld [vmem:[%s1829 + $0xc] sm:$0xf]
    %v1834 = vld [vmem:[%s1829 + $0x10] sm:$0xf]
    %v1835 = vld [vmem:[%s1829 + $0x14] sm:$0xf]
    %v1836 = vld [vmem:[%s1829 + $0x18] sm:$0xf]
    %v1837 = vld [vmem:[%s1829 + $0x1c] sm:$0xf]
    %v1846 = vunpack.c.l.b16 %v1830
    %v1847 = vunpack.c.l.b16 %v1831
    %v1848 = vunpack.c.l.b16 %v1832
    %v1849 = vunpack.c.l.b16 %v1833
    %v1850 = vunpack.c.l.b16 %v1834
    %v1851 = vunpack.c.l.b16 %v1835
    %v1852 = vunpack.c.l.b16 %v1836
    %v1853 = vunpack.c.l.b16 %v1837
    %v1854 = vpack.c.b16 %v1847, %v1846
    %v1855 = vpack.c.b16 %v1849, %v1848
    %v1856 = vpack.c.b16 %v1851, %v1850
    %v1857 = vpack.c.b16 %v1853, %v1852
    %v1863 = vsel %vm413, %v1828, 0
    %1865 = vmatprep.subr.bf16.mxu0 0
    %1866 = vmatpush1.bf16.msra.mxu0 %v1854
    %1867 = vmatprep.subr.bf16.mxu0 0
    %1868 = vmatpush1.bf16.msra.mxu0 %v1855
    %1869 = vmatprep.subr.bf16.mxu0 0
    %1870 = vmatpush1.bf16.msra.mxu0 %v1856
    %1871 = vmatprep.subr.bf16.mxu0 0
    %1872 = vmatpush1.bf16.msra.mxu0 %v1857
    %1873 = vmatprep.subr.bf16.mxu0 0
    %1874 = vmatpush1.bf16.msra.mxu0 0
    %1875 = vmatprep.subr.bf16.mxu0 0
    %1876 = vmatpush1.bf16.msra.mxu0 0
    %1877 = vmatprep.subr.bf16.mxu0 0
    %1878 = vmatpush1.bf16.msra.mxu0 0
    %1879 = vmatprep.subr.bf16.mxu0 0
    %1880 = vmatpush1.bf16.msra.mxu0 0
    %1881 = vmatprep.subr.bf16.mxu0 0
    %1882 = vmatpush1.bf16.msra.mxu0 0
    %1883 = vmatprep.subr.bf16.mxu0 0
    %1884 = vmatpush1.bf16.msra.mxu0 0
    %1885 = vmatprep.subr.bf16.mxu0 0
    %1886 = vmatpush1.bf16.msra.mxu0 0
    %1887 = vmatprep.subr.bf16.mxu0 0
    %1888 = vmatpush1.bf16.msra.mxu0 0
    %1889 = vmatprep.subr.bf16.mxu0 0
    %1890 = vmatpush1.bf16.msra.mxu0 0
    %1891 = vmatprep.subr.bf16.mxu0 0
    %1892 = vmatpush1.bf16.msra.mxu0 0
    %1893 = vmatprep.subr.bf16.mxu0 0
    %1894 = vmatpush1.bf16.msra.mxu0 0
    %1895 = vmatprep.subr.bf16.mxu0 0
    %1896 = vmatpush1.bf16.msra.mxu0 0
    %1897 = vmatprep.mubr.bf16.mxu0 0
    %1898 = vmatmul.mubr.bf16.gmra.mrb[0].mxu0 %v1863
    %v1899 = vpop.f32.mrb[0].mxu0
    %v1900 = vadd.f32 0.0, %v1899
    %v1901 = vpop.f32.mrb[0].mxu0
    %v1902 = vpop.f32.mrb[0].mxu0
    %v1903 = vadd.f32 0.0, %v1902
    %v1904 = vpop.f32.mrb[0].mxu0
    %1905 = vdwg.mxu0
    %v1906 = vadd.f32 %v1822, %v1900
    %v1907 = vadd.f32 %v1825, %v1903
    %v1908 = vadd.f32 %v1634, %v1906
    %v1909 = vadd.f32 %v1635, %v1907
    %v1910 = vlaneseq
    %v1911 = vshrl.u32 %v1910, 7
    %v1912 = vsub.s32 5, %v1911
    %v1913 = vrot.slane %v469, %v1912
    %v1914 = vmul.f32 %v1908, %v1913
    %v1915 = vmul.f32 %v1909, %v1913
    %v1916 = vlaneseq
    %v1917 = vshrl.u32 %v1916, 7
    %v1918 = vsub.s32 5, %v1917
    %v1919 = vrot.slane %v470, %v1918
    %v1920 = vadd.f32 %v1914, %v1919
    %v1921 = vadd.f32 %v1915, %v1919
    %v1922 = vmax.f32 %v1920, 0.0
    %v1923 = vmax.f32 %v1921, 0.0
    %v1924 = vld [vmem:[%s10] sm:$0x7]
    %v1925 = vpack.c.bf16 %v1923, %v1922
    %vm1926 = vcmask 113664
    %v1928 = vsel %vm1926, %v1924, 0
    %v1931 = vsel %vm126, %v1925, 0
    %1933 = vmatprep.subr.bf16.mxu0 0
    %1934 = vmatpush1.bf16.msra.mxu0 %v1931
    %1935 = vmatprep.subr.bf16.mxu0 0
    %1936 = vmatpush1.bf16.msra.mxu0 0
    %1937 = vmatprep.subr.bf16.mxu0 0
    %1938 = vmatpush1.bf16.msra.mxu0 0
    %1939 = vmatprep.subr.bf16.mxu0 0
    %1940 = vmatpush1.bf16.msra.mxu0 0
    %1941 = vmatprep.subr.bf16.mxu0 0
    %1942 = vmatpush1.bf16.msra.mxu0 0
    %1943 = vmatprep.subr.bf16.mxu0 0
    %1944 = vmatpush1.bf16.msra.mxu0 0
    %1945 = vmatprep.subr.bf16.mxu0 0
    %1946 = vmatpush1.bf16.msra.mxu0 0
    %1947 = vmatprep.subr.bf16.mxu0 0
    %1948 = vmatpush1.bf16.msra.mxu0 0
    %1949 = vmatprep.subr.bf16.mxu0 0
    %1950 = vmatpush1.bf16.msra.mxu0 0
    %1951 = vmatprep.subr.bf16.mxu0 0
    %1952 = vmatpush1.bf16.msra.mxu0 0
    %1953 = vmatprep.subr.bf16.mxu0 0
    %1954 = vmatpush1.bf16.msra.mxu0 0
    %1955 = vmatprep.subr.bf16.mxu0 0
    %1956 = vmatpush1.bf16.msra.mxu0 0
    %1957 = vmatprep.subr.bf16.mxu0 0
    %1958 = vmatpush1.bf16.msra.mxu0 0
    %1959 = vmatprep.subr.bf16.mxu0 0
    %1960 = vmatpush1.bf16.msra.mxu0 0
    %1961 = vmatprep.subr.bf16.mxu0 0
    %1962 = vmatpush1.bf16.msra.mxu0 0
    %1963 = vmatprep.subr.bf16.mxu0 0
    %1964 = vmatpush1.bf16.msra.mxu0 0
    %1965 = vmatprep.mubr.bf16.mxu0 0
    %1966 = vmatmul.mubr.bf16.gmra.mrb[0].mxu0 %v1928
    %v1967 = vpop.f32.mrb[0].mxu0
    %v1968 = vadd.f32 0.0, %v1967
    %v1969 = vpop.f32.mrb[0].mxu0
    %v1970 = vpop.f32.mrb[0].mxu0
    %v1971 = vpop.f32.mrb[0].mxu0
    %1972 = vdwg.mxu0
    %v1973 = vpack.c.bf16 %v1968, %v1968
    %s1974 = scalar_lea.vmem [#allocation6], 32
    %v1975 = vld [vmem:[%s1974] sm:$0xf]
    %v1976 = vld [vmem:[%s1974 + $0x4] sm:$0xf]
    %v1977 = vld [vmem:[%s1974 + $0x8] sm:$0xf]
    %v1978 = vld [vmem:[%s1974 + $0xc] sm:$0xf]
    %v1979 = vld [vmem:[%s1974 + $0x10] sm:$0xf]
    %v1980 = vld [vmem:[%s1974 + $0x14] sm:$0xf]
    %v1981 = vld [vmem:[%s1974 + $0x18] sm:$0xf]
    %v1982 = vld [vmem:[%s1974 + $0x1c] sm:$0xf]
    %v1991 = vunpack.c.l.b16 %v1975
    %v1992 = vunpack.c.l.b16 %v1976
    %v1993 = vunpack.c.l.b16 %v1977
    %v1994 = vunpack.c.l.b16 %v1978
    %v1995 = vunpack.c.l.b16 %v1979
    %v1996 = vunpack.c.l.b16 %v1980
    %v1997 = vunpack.c.l.b16 %v1981
    %v1998 = vunpack.c.l.b16 %v1982
    %v1999 = vpack.c.b16 %v1992, %v1991
    %v2000 = vpack.c.b16 %v1994, %v1993
    %v2001 = vpack.c.b16 %v1996, %v1995
    %v2002 = vpack.c.b16 %v1998, %v1997
    %v2008 = vsel %vm413, %v1973, 0
    %2010 = vmatprep.subr.bf16.mxu0 0
    %2011 = vmatpush1.bf16.msra.mxu0 %v1999
    %2012 = vmatprep.subr.bf16.mxu0 0
    %2013 = vmatpush1.bf16.msra.mxu0 %v2000
    %2014 = vmatprep.subr.bf16.mxu0 0
    %2015 = vmatpush1.bf16.msra.mxu0 %v2001
    %2016 = vmatprep.subr.bf16.mxu0 0
    %2017 = vmatpush1.bf16.msra.mxu0 %v2002
    %2018 = vmatprep.subr.bf16.mxu0 0
    %2019 = vmatpush1.bf16.msra.mxu0 0
    %2020 = vmatprep.subr.bf16.mxu0 0
    %2021 = vmatpush1.bf16.msra.mxu0 0
    %2022 = vmatprep.subr.bf16.mxu0 0
    %2023 = vmatpush1.bf16.msra.mxu0 0
    %2024 = vmatprep.subr.bf16.mxu0 0
    %2025 = vmatpush1.bf16.msra.mxu0 0
    %2026 = vmatprep.subr.bf16.mxu0 0
    %2027 = vmatpush1.bf16.msra.mxu0 0
    %2028 = vmatprep.subr.bf16.mxu0 0
    %2029 = vmatpush1.bf16.msra.mxu0 0
    %2030 = vmatprep.subr.bf16.mxu0 0
    %2031 = vmatpush1.bf16.msra.mxu0 0
    %2032 = vmatprep.subr.bf16.mxu0 0
    %2033 = vmatpush1.bf16.msra.mxu0 0
    %2034 = vmatprep.subr.bf16.mxu0 0
    %2035 = vmatpush1.bf16.msra.mxu0 0
    %2036 = vmatprep.subr.bf16.mxu0 0
    %2037 = vmatpush1.bf16.msra.mxu0 0
    %2038 = vmatprep.subr.bf16.mxu0 0
    %2039 = vmatpush1.bf16.msra.mxu0 0
    %2040 = vmatprep.subr.bf16.mxu0 0
    %2041 = vmatpush1.bf16.msra.mxu0 0
    %2042 = vmatprep.mubr.bf16.mxu0 0
    %2043 = vmatmul.mubr.bf16.gmra.mrb[0].mxu0 %v2008
    %v2044 = vpop.f32.mrb[0].mxu0
    %v2045 = vadd.f32 0.0, %v2044
    %v2046 = vpop.f32.mrb[0].mxu0
    %v2047 = vpop.f32.mrb[0].mxu0
    %v2048 = vpop.f32.mrb[0].mxu0
    %2049 = vdwg.mxu0
    %v2050 = vld [vmem:[%s11] sm:$0x1]
    %v2051 = vpack.c.bf16 %v2045, %v2045
    %vm2052 = vcmask 48128
    %v2054 = vsel %vm2052, %v2050, 0
    %vm2056 = vcmask 1042432
    %v2058 = vsel %vm2056, %v2051, 0
    %2060 = vmatprep.subr.bf16.mxu0 0
    %2061 = vmatpush1.bf16.msra.mxu0 %v2058
    %2062 = vmatprep.subr.bf16.mxu0 0
    %2063 = vmatpush1.bf16.msra.mxu0 0
    %2064 = vmatprep.subr.bf16.mxu0 0
    %2065 = vmatpush1.bf16.msra.mxu0 0
    %2066 = vmatprep.subr.bf16.mxu0 0
    %2067 = vmatpush1.bf16.msra.mxu0 0
    %2068 = vmatprep.subr.bf16.mxu0 0
    %2069 = vmatpush1.bf16.msra.mxu0 0
    %2070 = vmatprep.subr.bf16.mxu0 0
    %2071 = vmatpush1.bf16.msra.mxu0 0
    %2072 = vmatprep.subr.bf16.mxu0 0
    %2073 = vmatpush1.bf16.msra.mxu0 0
    %2074 = vmatprep.subr.bf16.mxu0 0
    %2075 = vmatpush1.bf16.msra.mxu0 0
    %2076 = vmatprep.subr.bf16.mxu0 0
    %2077 = vmatpush1.bf16.msra.mxu0 0
    %2078 = vmatprep.subr.bf16.mxu0 0
    %2079 = vmatpush1.bf16.msra.mxu0 0
    %2080 = vmatprep.subr.bf16.mxu0 0
    %2081 = vmatpush1.bf16.msra.mxu0 0
    %2082 = vmatprep.subr.bf16.mxu0 0
    %2083 = vmatpush1.bf16.msra.mxu0 0
    %2084 = vmatprep.subr.bf16.mxu0 0
    %2085 = vmatpush1.bf16.msra.mxu0 0
    %2086 = vmatprep.subr.bf16.mxu0 0
    %2087 = vmatpush1.bf16.msra.mxu0 0
    %2088 = vmatprep.subr.bf16.mxu0 0
    %2089 = vmatpush1.bf16.msra.mxu0 0
    %2090 = vmatprep.subr.bf16.mxu0 0
    %2091 = vmatpush1.bf16.msra.mxu0 0
    %2092 = vmatprep.mubr.bf16.mxu0 0
    %2093 = vmatmul.mubr.bf16.gmra.mrb[0].mxu0 %v2054
    %v2094 = vpop.f32.mrb[0].mxu0
    %v2095 = vadd.f32 0.0, %v2094
    %v2096 = vpop.f32.mrb[0].mxu0
    %v2097 = vpop.f32.mrb[0].mxu0
    %v2098 = vpop.f32.mrb[0].mxu0
    %2099 = vdwg.mxu0
    %v2100 = vld [vmem:[%s15] ss:$4 sm:$0x3]
    %v2101 = vld [vmem:[%s15 + $0x1] sm:$0x1]
    %v2102 = vld [vmem:[%s15 + $0x2] sm:$0x1]
    %v2103 = vpack.c.bf16 %v2095, %v2095
    %v2104 = vld [vmem:[#allocation7] sm:$0xff]
    %v2105 = vld [vmem:[#allocation7 + $0x8] sm:$0xff]
    %v2106 = vld [vmem:[#allocation7 + $0x10] sm:$0xff]
    %v2107 = vld [vmem:[#allocation7 + $0x18] sm:$0xff]
    %v2108 = vld [vmem:[#allocation7 + $0x20] sm:$0xff]
    %v2109 = vld [vmem:[#allocation7 + $0x28] sm:$0xff]
    %v2110 = vld [vmem:[#allocation7 + $0x30] sm:$0xff]
    %v2111 = vld [vmem:[#allocation7 + $0x38] sm:$0xff]
    %v2113 = vlaneseq
    %v2114 = vshrl.u32 %v2113, 7
    %v2115 = vsub.s32 0, %v2114
    %v2116 = vrot.slane %v2100, %v2115
    %v2117 = vlaneseq
    %v2118 = vshrl.u32 %v2117, 7
    %v2119 = vsub.s32 1, %v2118
    %v2120 = vrot.slane %v2100, %v2119
    %v2131 = vunpack.c.l.b16 %v2104
    %v2132 = vunpack.c.h.b16 %v2104
    %v2133 = vunpack.c.l.b16 %v2105
    %v2134 = vunpack.c.h.b16 %v2105
    %v2135 = vunpack.c.l.b16 %v2106
    %v2136 = vunpack.c.h.b16 %v2106
    %v2137 = vunpack.c.l.b16 %v2107
    %v2138 = vunpack.c.h.b16 %v2107
    %v2139 = vunpack.c.l.b16 %v2108
    %v2140 = vunpack.c.h.b16 %v2108
    %v2141 = vunpack.c.l.b16 %v2109
    %v2142 = vunpack.c.h.b16 %v2109
    %v2143 = vunpack.c.l.b16 %v2110
    %v2144 = vunpack.c.h.b16 %v2110
    %v2145 = vunpack.c.l.b16 %v2111
    %v2146 = vunpack.c.h.b16 %v2111
    %v2147 = vpack.c.b16 %v2133, %v2131
    %v2148 = vpack.c.b16 %v2134, %v2132
    %v2149 = vpack.c.b16 %v2137, %v2135
    %v2150 = vpack.c.b16 %v2138, %v2136
    %v2151 = vpack.c.b16 %v2141, %v2139
    %v2152 = vpack.c.b16 %v2142, %v2140
    %v2153 = vpack.c.b16 %v2145, %v2143
    %v2154 = vpack.c.b16 %v2146, %v2144
    %v2164 = vsel %vm413, %v2103, 0
    %2166 = vmatprep.subr.bf16.mxu0 %v2148
    %2167 = vmatpush1.bf16.msra.mxu0 %v2147
    %2168 = vmatprep.subr.bf16.mxu0 %v2150
    %2169 = vmatpush1.bf16.msra.mxu0 %v2149
    %2170 = vmatprep.subr.bf16.mxu0 %v2152
    %2171 = vmatpush1.bf16.msra.mxu0 %v2151
    %2172 = vmatprep.subr.bf16.mxu0 %v2154
    %2173 = vmatpush1.bf16.msra.mxu0 %v2153
    %2174 = vmatprep.subr.bf16.mxu0 0
    %2175 = vmatpush1.bf16.msra.mxu0 0
    %2176 = vmatprep.subr.bf16.mxu0 0
    %2177 = vmatpush1.bf16.msra.mxu0 0
    %2178 = vmatprep.subr.bf16.mxu0 0
    %2179 = vmatpush1.bf16.msra.mxu0 0
    %2180 = vmatprep.subr.bf16.mxu0 0
    %2181 = vmatpush1.bf16.msra.mxu0 0
    %2182 = vmatprep.subr.bf16.mxu0 0
    %2183 = vmatpush1.bf16.msra.mxu0 0
    %2184 = vmatprep.subr.bf16.mxu0 0
    %2185 = vmatpush1.bf16.msra.mxu0 0
    %2186 = vmatprep.subr.bf16.mxu0 0
    %2187 = vmatpush1.bf16.msra.mxu0 0
    %2188 = vmatprep.subr.bf16.mxu0 0
    %2189 = vmatpush1.bf16.msra.mxu0 0
    %2190 = vmatprep.subr.bf16.mxu0 0
    %2191 = vmatpush1.bf16.msra.mxu0 0
    %2192 = vmatprep.subr.bf16.mxu0 0
    %2193 = vmatpush1.bf16.msra.mxu0 0
    %2194 = vmatprep.subr.bf16.mxu0 0
    %2195 = vmatpush1.bf16.msra.mxu0 0
    %2196 = vmatprep.subr.bf16.mxu0 0
    %2197 = vmatpush1.bf16.msra.mxu0 0
    %2198 = vmatprep.mubr.bf16.mxu0 0
    %2199 = vmatmul.mubr.bf16.gmra.mrb[0].mxu0 %v2164
    %v2200 = vpop.f32.mrb[0].mxu0
    %v2201 = vadd.f32 %v2116, %v2200
    %v2202 = vpop.f32.mrb[0].mxu0
    %v2203 = vadd.f32 %v2120, %v2202
    %v2204 = vpop.f32.mrb[0].mxu0
    %v2205 = vpop.f32.mrb[0].mxu0
    %2206 = vdwg.mxu0
    %v2207 = vmax.f32 %v2201, 0.0
    %v2208 = vmax.f32 %v2203, 0.0
    %v2209 = vpack.c.bf16 %v2207, %v2207
    %v2210 = vpack.c.bf16 %v2208, %v2208
    %v2211 = vld [vmem:[%s13] sm:$0xf]
    %v2212 = vld [vmem:[%s13 + $0x4] sm:$0xf]
    %v2213 = vld [vmem:[%s13 + $0x8] sm:$0xf]
    %v2214 = vld [vmem:[%s13 + $0xc] sm:$0xf]
    %v2215 = vld [vmem:[%s13 + $0x10] sm:$0xf]
    %v2216 = vld [vmem:[%s13 + $0x14] sm:$0xf]
    %v2217 = vld [vmem:[%s13 + $0x18] sm:$0xf]
    %v2218 = vld [vmem:[%s13 + $0x1c] sm:$0xf]
    %v2219 = vld [vmem:[%s13 + $0x20] sm:$0xf]
    %v2220 = vld [vmem:[%s13 + $0x24] sm:$0xf]
    %v2221 = vld [vmem:[%s13 + $0x28] sm:$0xf]
    %v2222 = vld [vmem:[%s13 + $0x2c] sm:$0xf]
    %v2223 = vld [vmem:[%s13 + $0x30] sm:$0xf]
    %v2224 = vld [vmem:[%s13 + $0x34] sm:$0xf]
    %v2225 = vld [vmem:[%s13 + $0x38] sm:$0xf]
    %v2226 = vld [vmem:[%s13 + $0x3c] sm:$0xf]
    %v2227 = vld [vmem:[%s13 + $0x40] sm:$0xf]
    %v2228 = vld [vmem:[%s13 + $0x44] sm:$0xf]
    %v2229 = vld [vmem:[%s13 + $0x48] sm:$0xf]
    %v2230 = vld [vmem:[%s13 + $0x4c] sm:$0xf]
    %v2231 = vld [vmem:[%s13 + $0x50] sm:$0xf]
    %v2232 = vld [vmem:[%s13 + $0x54] sm:$0xf]
    %v2233 = vld [vmem:[%s13 + $0x58] sm:$0xf]
    %v2234 = vld [vmem:[%s13 + $0x5c] sm:$0xf]
    %v2235 = vld [vmem:[%s13 + $0x60] sm:$0xf]
    %v2236 = vld [vmem:[%s13 + $0x64] sm:$0xf]
    %v2237 = vld [vmem:[%s13 + $0x68] sm:$0xf]
    %v2238 = vld [vmem:[%s13 + $0x6c] sm:$0xf]
    %v2239 = vld [vmem:[%s13 + $0x70] sm:$0xf]
    %v2240 = vld [vmem:[%s13 + $0x74] sm:$0xf]
    %v2241 = vld [vmem:[%s13 + $0x78] sm:$0xf]
    %v2242 = vld [vmem:[%s13 + $0x7c] sm:$0xf]
    %v2243 = vlaneseq
    %v2244 = vshrl.u32 %v2243, 7
    %v2245 = vsub.s32 0, %v2244
    %v2246 = vrot.slane %v2101, %v2245
    %v2279 = vunpack.c.l.b16 %v2211
    %v2280 = vunpack.c.l.b16 %v2212
    %v2281 = vunpack.c.l.b16 %v2213
    %v2282 = vunpack.c.l.b16 %v2214
    %v2283 = vunpack.c.l.b16 %v2215
    %v2284 = vunpack.c.l.b16 %v2216
    %v2285 = vunpack.c.l.b16 %v2217
    %v2286 = vunpack.c.l.b16 %v2218
    %v2287 = vunpack.c.l.b16 %v2219
    %v2288 = vunpack.c.l.b16 %v2220
    %v2289 = vunpack.c.l.b16 %v2221
    %v2290 = vunpack.c.l.b16 %v2222
    %v2291 = vunpack.c.l.b16 %v2223
    %v2292 = vunpack.c.l.b16 %v2224
    %v2293 = vunpack.c.l.b16 %v2225
    %v2294 = vunpack.c.l.b16 %v2226
    %v2295 = vunpack.c.l.b16 %v2227
    %v2296 = vunpack.c.l.b16 %v2228
    %v2297 = vunpack.c.l.b16 %v2229
    %v2298 = vunpack.c.l.b16 %v2230
    %v2299 = vunpack.c.l.b16 %v2231
    %v2300 = vunpack.c.l.b16 %v2232
    %v2301 = vunpack.c.l.b16 %v2233
    %v2302 = vunpack.c.l.b16 %v2234
    %v2303 = vunpack.c.l.b16 %v2235
    %v2304 = vunpack.c.l.b16 %v2236
    %v2305 = vunpack.c.l.b16 %v2237
    %v2306 = vunpack.c.l.b16 %v2238
    %v2307 = vunpack.c.l.b16 %v2239
    %v2308 = vunpack.c.l.b16 %v2240
    %v2309 = vunpack.c.l.b16 %v2241
    %v2310 = vunpack.c.l.b16 %v2242
    %v2311 = vpack.c.b16 %v2280, %v2279
    %v2312 = vpack.c.b16 %v2282, %v2281
    %v2313 = vpack.c.b16 %v2284, %v2283
    %v2314 = vpack.c.b16 %v2286, %v2285
    %v2315 = vpack.c.b16 %v2288, %v2287
    %v2316 = vpack.c.b16 %v2290, %v2289
    %v2317 = vpack.c.b16 %v2292, %v2291
    %v2318 = vpack.c.b16 %v2294, %v2293
    %v2319 = vpack.c.b16 %v2296, %v2295
    %v2320 = vpack.c.b16 %v2298, %v2297
    %v2321 = vpack.c.b16 %v2300, %v2299
    %v2322 = vpack.c.b16 %v2302, %v2301
    %v2323 = vpack.c.b16 %v2304, %v2303
    %v2324 = vpack.c.b16 %v2306, %v2305
    %v2325 = vpack.c.b16 %v2308, %v2307
    %v2326 = vpack.c.b16 %v2310, %v2309
    %2343 = vmatprep.subr.bf16.mxu0 0
    %2344 = vmatpush1.bf16.msra.mxu0 %v2311
    %2345 = vmatprep.subr.bf16.mxu0 0
    %2346 = vmatpush1.bf16.msra.mxu0 %v2312
    %2347 = vmatprep.subr.bf16.mxu0 0
    %2348 = vmatpush1.bf16.msra.mxu0 %v2313
    %2349 = vmatprep.subr.bf16.mxu0 0
    %2350 = vmatpush1.bf16.msra.mxu0 %v2314
    %2351 = vmatprep.subr.bf16.mxu0 0
    %2352 = vmatpush1.bf16.msra.mxu0 %v2315
    %2353 = vmatprep.subr.bf16.mxu0 0
    %2354 = vmatpush1.bf16.msra.mxu0 %v2316
    %2355 = vmatprep.subr.bf16.mxu0 0
    %2356 = vmatpush1.bf16.msra.mxu0 %v2317
    %2357 = vmatprep.subr.bf16.mxu0 0
    %2358 = vmatpush1.bf16.msra.mxu0 %v2318
    %2359 = vmatprep.subr.bf16.mxu0 0
    %2360 = vmatpush1.bf16.msra.mxu0 %v2319
    %2361 = vmatprep.subr.bf16.mxu0 0
    %2362 = vmatpush1.bf16.msra.mxu0 %v2320
    %2363 = vmatprep.subr.bf16.mxu0 0
    %2364 = vmatpush1.bf16.msra.mxu0 %v2321
    %2365 = vmatprep.subr.bf16.mxu0 0
    %2366 = vmatpush1.bf16.msra.mxu0 %v2322
    %2367 = vmatprep.subr.bf16.mxu0 0
    %2368 = vmatpush1.bf16.msra.mxu0 %v2323
    %2369 = vmatprep.subr.bf16.mxu0 0
    %2370 = vmatpush1.bf16.msra.mxu0 %v2324
    %2371 = vmatprep.subr.bf16.mxu0 0
    %2372 = vmatpush1.bf16.msra.mxu0 %v2325
    %2373 = vmatprep.subr.bf16.mxu0 0
    %2374 = vmatpush1.bf16.msra.mxu0 %v2326
    %2375 = vmatprep.mubr.bf16.mxu0 %v2210
    %2376 = vmatmul.mubr.bf16.gmra.mrb[0].mxu0 %v2209
    %v2377 = vpop.f32.mrb[0].mxu0
    %v2378 = vadd.f32 %v2246, %v2377
    %v2379 = vpop.f32.mrb[0].mxu0
    %v2380 = vpop.f32.mrb[0].mxu0
    %v2381 = vpop.f32.mrb[0].mxu0
    %2382 = vdwg.mxu0
    %v2383 = vmax.f32 %v2378, 0.0
    %v2384 = vpack.c.bf16 %v2383, %v2383
    %v2385 = vld [vmem:[%s14] sm:$0xf]
    %v2386 = vld [vmem:[%s14 + $0x4] sm:$0xf]
    %v2387 = vld [vmem:[%s14 + $0x8] sm:$0xf]
    %v2388 = vld [vmem:[%s14 + $0xc] sm:$0xf]
    %v2389 = vld [vmem:[%s14 + $0x10] sm:$0xf]
    %v2390 = vld [vmem:[%s14 + $0x14] sm:$0xf]
    %v2391 = vld [vmem:[%s14 + $0x18] sm:$0xf]
    %v2392 = vld [vmem:[%s14 + $0x1c] sm:$0xf]
    %v2393 = vld [vmem:[%s14 + $0x20] sm:$0xf]
    %v2394 = vld [vmem:[%s14 + $0x24] sm:$0xf]
    %v2395 = vld [vmem:[%s14 + $0x28] sm:$0xf]
    %v2396 = vld [vmem:[%s14 + $0x2c] sm:$0xf]
    %v2397 = vlaneseq
    %v2398 = vshrl.u32 %v2397, 7
    %v2399 = vsub.s32 0, %v2398
    %v2400 = vrot.slane %v2102, %v2399
    %v2413 = vunpack.c.l.b16 %v2385
    %v2414 = vunpack.c.l.b16 %v2386
    %v2415 = vunpack.c.l.b16 %v2387
    %v2416 = vunpack.c.l.b16 %v2388
    %v2417 = vunpack.c.l.b16 %v2389
    %v2418 = vunpack.c.l.b16 %v2390
    %v2419 = vunpack.c.l.b16 %v2391
    %v2420 = vunpack.c.l.b16 %v2392
    %v2421 = vunpack.c.l.b16 %v2393
    %v2422 = vunpack.c.l.b16 %v2394
    %v2423 = vunpack.c.l.b16 %v2395
    %v2424 = vunpack.c.l.b16 %v2396
    %v2425 = vpack.c.b16 %v2414, %v2413
    %v2426 = vpack.c.b16 %v2416, %v2415
    %v2427 = vpack.c.b16 %v2418, %v2417
    %v2428 = vpack.c.b16 %v2420, %v2419
    %v2429 = vpack.c.b16 %v2422, %v2421
    %v2430 = vpack.c.b16 %v2424, %v2423
    %vm2437 = vcmask 785408
    %v2439 = vsel %vm2437, %v2384, 0
    %2441 = vmatprep.subr.bf16.mxu0 0
    %2442 = vmatpush1.bf16.msra.mxu0 %v2425
    %2443 = vmatprep.subr.bf16.mxu0 0
    %2444 = vmatpush1.bf16.msra.mxu0 %v2426
    %2445 = vmatprep.subr.bf16.mxu0 0
    %2446 = vmatpush1.bf16.msra.mxu0 %v2427
    %2447 = vmatprep.subr.bf16.mxu0 0
    %2448 = vmatpush1.bf16.msra.mxu0 %v2428
    %2449 = vmatprep.subr.bf16.mxu0 0
    %2450 = vmatpush1.bf16.msra.mxu0 %v2429
    %2451 = vmatprep.subr.bf16.mxu0 0
    %2452 = vmatpush1.bf16.msra.mxu0 %v2430
    %2453 = vmatprep.subr.bf16.mxu0 0
    %2454 = vmatpush1.bf16.msra.mxu0 0
    %2455 = vmatprep.subr.bf16.mxu0 0
    %2456 = vmatpush1.bf16.msra.mxu0 0
    %2457 = vmatprep.subr.bf16.mxu0 0
    %2458 = vmatpush1.bf16.msra.mxu0 0
    %2459 = vmatprep.subr.bf16.mxu0 0
    %2460 = vmatpush1.bf16.msra.mxu0 0
    %2461 = vmatprep.subr.bf16.mxu0 0
    %2462 = vmatpush1.bf16.msra.mxu0 0
    %2463 = vmatprep.subr.bf16.mxu0 0
    %2464 = vmatpush1.bf16.msra.mxu0 0
    %2465 = vmatprep.subr.bf16.mxu0 0
    %2466 = vmatpush1.bf16.msra.mxu0 0
    %2467 = vmatprep.subr.bf16.mxu0 0
    %2468 = vmatpush1.bf16.msra.mxu0 0
    %2469 = vmatprep.subr.bf16.mxu0 0
    %2470 = vmatpush1.bf16.msra.mxu0 0
    %2471 = vmatprep.subr.bf16.mxu0 0
    %2472 = vmatpush1.bf16.msra.mxu0 0
    %2473 = vmatprep.mubr.bf16.mxu0 0
    %2474 = vmatmul.mubr.bf16.gmra.mrb[0].mxu0 %v2439
    %v2475 = vpop.f32.mrb[0].mxu0
    %v2476 = vadd.f32 %v2400, %v2475
    %v2477 = vpop.f32.mrb[0].mxu0
    %v2478 = vpop.f32.mrb[0].mxu0
    %v2479 = vpop.f32.mrb[0].mxu0
    %2480 = vdwg.mxu0
    %vm2481 = vcmask 1024
    %2482 = vst.msk [vmem:[%s16] sm:$0x3] %vm2481, %v2476
    // Predicated region
    $region82: #{tpu_custom_call.1} parent=1 // pred_check
      _
    $region83: #{tpu_custom_call.1} parent=1 // pred_check_branch
      %2484 = sbr.rel (0) target = $region85
    $region84: #{tpu_custom_call.1} parent=1 // pred_region
      _
    $region85: #{tpu_custom_call.1} parent=1 // pred_fallthru
      _
    // Predicated region
    $region86: #{tpu_custom_call.1} parent=1 // pred_check
      _
    $region87: #{tpu_custom_call.1} parent=1 // pred_check_branch
      %2486 = sbr.rel (0) target = $region89
    $region88: #{tpu_custom_call.1} parent=1 // pred_region
      _
    $region89: #{tpu_custom_call.1} parent=1 // pred_fallthru
      _
    %2487 = vsyncpa [#allocation3], 1
    %2488 = vsyncpa [#allocation5], 1
    %2489 = vsyncpa [#allocation8], 1

</llo_original>
